<compile_context>
chip_gen: v6e
topology: v6e:2x2x1
jax: 0.10.0
libtpu: 0.0.40
codegen_flags: <defaults>
</compile_context>

<pallas_src>
import jax
import jax.numpy as jnp
from jax.experimental import pallas as pl
from jax.experimental.pallas import tpu as pltpu


# ----------------------------------------------------------------------------
# Fused kernel: conv3x3(same) + bias + ReLU + maxpool2x2 + flatten + fc
# ----------------------------------------------------------------------------
def _make_fused_kernel(c_mid, h, w):
    wp = w + 2            # padded row stride
    hwp = h * wp          # "wide" conv-output columns (2 junk columns per row)

    def kernel(xp_ref, wc_ref, bc_ref, s_ref, wf_ref, bf_ref, flat_ref, fc_ref):
        # xp_ref  : (1, C_in, XL)            f32  zero-padded input, rows flattened
        # wc_ref  : (9, C_mid, C_in)         bf16 conv weight per 3x3 tap
        # bc_ref  : (C_mid, 1)               f32  conv bias
        # s_ref   : (4, hwp, Ho*Wo)          f32  one-hot pool-selection matrices
        # wf_ref  : (C_mid, Ho*Wo, n_cls)    bf16 fc weight (c-major blocks)
        # bf_ref  : (1, n_cls)               f32  fc bias
        # flat_ref: (1, C_mid, Ho*Wo)        f32  flattened features (res[0])
        # fc_ref  : (1, 1, n_cls)            f32  fc output            (res[1])

        # ---- 3x3 'same' conv: 9 shifted-window matmuls, bf16 in / f32 accum ----
        acc = None
        for ky in range(3):
            for kx in range(3):
                off = ky * wp + kx
                tap = xp_ref[0, :, off:off + hwp].astype(jnp.bfloat16)  # (C_in, hwp)
                con = jnp.dot(wc_ref[3 * ky + kx], tap,
                              preferred_element_type=jnp.float32)       # (C_mid, hwp)
                acc = con if acc is None else acc + con
        acc = jnp.maximum(acc + bc_ref[...], 0.0)        # conv bias + ReLU

        # ---- 2x2/2 max pool: 4 one-hot selection matmuls (MXU gather) + max ----
        pooled = None
        for t in range(4):
            sel = jnp.dot(acc, s_ref[t], preferred_element_type=jnp.float32)
            pooled = sel if pooled is None else jnp.maximum(pooled, sel)
        # pooled: (C_mid, Ho*Wo), already in PyTorch x.view(N, -1) minor order.

        flat_ref[0] = pooled                             # res[0]: flattened feats

        # ---- fc on the flattened features ----
        out = bf_ref[...]                                # (1, n_cls) f32
        for c in range(c_mid):
            out = out + jnp.dot(pooled[c:c + 1, :].astype(jnp.bfloat16),
                                wf_ref[c], preferred_element_type=jnp.float32)
        fc_ref[0] = out                                  # res[1]: fc output

    return kernel


# ----------------------------------------------------------------------------
# Forward builder (mirrors the FeatureExtractor loop: res = [flat, fc_out])
# ----------------------------------------------------------------------------
def build_forward(c_in, c_mid, h, w, n_classes):
    wp = w + 2
    hwp = h * wp
    ho, wo = h // 2, w // 2
    xl = (h + 3) * wp          # (1,2) H-pad: 1 row of zeros each side for the
                               # 'same' conv + 1 extra tail row so every tap
                               # window [off, off + hwp) stays in-bounds.
    kernel = _make_fused_kernel(c_mid, h, w)

    @jax.jit
    def forward(x, p):
        n = x.shape[0]
        xp = jnp.pad(x, ((0, 0), (0, 0), (1, 2), (1, 1))).reshape(n, c_in, xl)
        flat3, fc3 = pl.pallas_call(
            kernel,
            grid=(n,),
            in_specs=[
                pl.BlockSpec((1, c_in, xl), lambda i: (i, 0, 0)),
                pl.BlockSpec((9, c_mid, c_in), lambda i: (0, 0, 0)),
                pl.BlockSpec((c_mid, 1), lambda i: (0, 0)),
                pl.BlockSpec((4, hwp, ho * wo), lambda i: (0, 0, 0)),
                pl.BlockSpec((c_mid, ho * wo, n_classes), lambda i: (0, 0, 0)),
                pl.BlockSpec((1, n_classes), lambda i: (0, 0)),
            ],
            out_specs=[
                pl.BlockSpec((1, c_mid, ho * wo), lambda i: (i, 0, 0)),
                pl.BlockSpec((1, 1, n_classes), lambda i: (i, 0, 0)),
            ],
            out_shape=[
                jax.ShapeDtypeStruct((n, c_mid, ho * wo), jnp.float32),
                jax.ShapeDtypeStruct((n, 1, n_classes), jnp.float32),
            ],
            compiler_params=pltpu.CompilerParams(
                dimension_semantics=("parallel",)),   # v7x: one batch elem / TC
        )(xp, p["wc"], p["bc"], p["S"], p["wf"], p["bf"])
        # FeatureExtractor semantics: res = [x.view(N, -1) before fc, fc(x)]
        flat = flat3.reshape(n, c_mid * ho * wo)      # contiguous -> bitcast
        return [flat, fc3.reshape(n, n_classes)]

    return forward


# ----------------------------------------------------------------------------
# Parameters (PyTorch layout) and one-time packing into kernel layout
# ----------------------------------------------------------------------------
def init_params(key, c_in=4, c_mid=8, h=16, w=16, n_classes=10):
    k1, k2, k3, k4 = jax.random.split(key, 4)
    feat = c_mid * (h // 2) * (w // 2)
    return {
        "conv_w": 0.1 * jax.random.normal(k1, (c_mid, c_in, 3, 3), jnp.float32),
        "conv_b": 0.1 * jax.random.normal(k2, (c_mid,), jnp.float32),
        "fc_w": 0.05 * jax.random.normal(k3, (n_classes, feat), jnp.float32),
        "fc_b": 0.05 * jax.random.normal(k4, (n_classes,), jnp.float32),
    }


def pack_params(params, h=16, w=16):
    """Hoisted (run once): weight re-layout + pool selection matrices."""
    c_mid, c_in, _, _ = params["conv_w"].shape
    n_classes = params["fc_w"].shape[0]
    wp = w + 2
    hwp = h * wp
    ho, wo = h // 2, w // 2

    # conv weight: tap-major (ky, kx), then (out, in) -> (9, C_mid, C_in)
    wc = jnp.transpose(params["conv_w"], (2, 3, 0, 1)).reshape(9, c_mid, c_in)
    # fc weight in c-major blocks matching x.view(N, -1): (C_mid, Ho*Wo, n_cls)
    wf = params["fc_w"].T.reshape(c_mid, ho * wo, n_classes)

    # One-hot selection matrices: S[2*dy+dx, (2ho+dy)*wp + 2wo+dx, ho*Wo+wo] = 1
    sel = jnp.zeros((4, hwp, ho * wo), jnp.float32)
    cols = jnp.arange(ho * wo)
    for dy in range(2):
        for dx in range(2):
            rows = (wp * (2 * jnp.arange(ho)[:, None] + dy)
                    + 2 * jnp.arange(wo)[None, :] + dx).reshape(-1)
            sel = sel.at[2 * dy + dx, rows, cols].set(1.0)

    return {
        "wc": wc.astype(jnp.bfloat16),
        "bc": params["conv_b"].reshape(c_mid, 1).astype(jnp.float32),
        "S": sel,
        "wf": wf.astype(jnp.bfloat16),
        "bf": params["fc_b"].reshape(1, n_classes).astype(jnp.float32),
    }


# ----------------------------------------------------------------------------
# Pure-JAX reference (PyTorch semantics, highest precision)
# ----------------------------------------------------------------------------
def reference_forward(x, params):
    conv = jax.lax.conv_general_dilated(
        x, params["conv_w"], window_strides=(1, 1), padding="SAME",
        dimension_numbers=("NCHW", "OIHW", "NCHW"),
        precision=jax.lax.Precision.HIGHEST,
    ) + params["conv_b"][None, :, None, None]
    act = jnp.maximum(conv, 0.0)
    n, c, hh, ww = act.shape
    pooled = jnp.max(act.reshape(n, c, hh // 2, 2, ww // 2, 2), axis=(3, 5))
    flat = pooled.reshape(n, -1)
    out = jnp.dot(flat, params["fc_w"].T,
                  precision=jax.lax.Precision.HIGHEST) + params["fc_b"]
    return [flat, out]


if __name__ == "__main__":
    key = jax.random.PRNGKey(0)
    kx, kp = jax.random.split(key)

    N, C_IN, H, W = 2, 4, 16, 16
    C_MID, N_CLASSES = 8, 10

    x = jax.random.normal(kx, (N, C_IN, H, W), jnp.float32)
    params = init_params(kp, C_IN, C_MID, H, W, N_CLASSES)
    packed = pack_params(params, H, W)            # one-time weight packing
    forward = build_forward(C_IN, C_MID, H, W, N_CLASSES)

    res = forward(x, packed)
    res = jax.block_until_ready(res)

    assert res[0].shape == (N, C_MID * (H // 2) * (W // 2))
    assert res[1].shape == (N, N_CLASSES)

    ref = reference_forward(x, params)
    assert bool(jnp.allclose(res[0], ref[0], rtol=2e-2, atol=2e-2))
    assert bool(jnp.allclose(res[1], ref[1], rtol=2e-2, atol=2e-2))

    print("KERNEL_OK")
</pallas_src>

<mosaic_0001>
module attributes {stable_mosaic.version = 11 : i64} {
  func.func @kernel(%arg0: i32, %arg1: memref<1x4x342xf32, #tpu.memory_space<vmem>>, %arg2: memref<9x8x4xbf16, #tpu.memory_space<vmem>>, %arg3: memref<8x1xf32, #tpu.memory_space<vmem>>, %arg4: memref<4x288x64xf32, #tpu.memory_space<vmem>>, %arg5: memref<8x64x10xbf16, #tpu.memory_space<vmem>>, %arg6: memref<1x10xf32, #tpu.memory_space<vmem>>, %arg7: memref<1x8x64xf32, #tpu.memory_space<vmem>>, %arg8: memref<1x1x10xf32, #tpu.memory_space<vmem>>) attributes {dimension_semantics = [#tpu.dimension_semantics<parallel>], iteration_bounds = array<i64: 2>, scalar_prefetch = 0 : i64, scratch_operands = 0 : i64, tpu.core_type = #tpu.core_type<tc>, window_params = [{transform_indices = @transform_0, window_bounds = array<i64: 1, 4, 342>}, {pipeline_mode = #tpu.pipeline_mode<synchronous>, transform_indices = @transform_1, window_bounds = array<i64: 9, 8, 4>}, {pipeline_mode = #tpu.pipeline_mode<synchronous>, transform_indices = @transform_2, window_bounds = array<i64: 8, 1>}, {pipeline_mode = #tpu.pipeline_mode<synchronous>, transform_indices = @transform_3, window_bounds = array<i64: 4, 288, 64>}, {pipeline_mode = #tpu.pipeline_mode<synchronous>, transform_indices = @transform_4, window_bounds = array<i64: 8, 64, 10>}, {pipeline_mode = #tpu.pipeline_mode<synchronous>, transform_indices = @transform_5, window_bounds = array<i64: 1, 10>}, {transform_indices = @transform_6, window_bounds = array<i64: 1, 8, 64>}, {transform_indices = @transform_7, window_bounds = array<i64: 1, 1, 10>}]} {
    %c0 = arith.constant 0 : index
    %c0_0 = arith.constant 0 : index
    %c0_1 = arith.constant 0 : index
    %0 = vector.load %arg1[%c0, %c0_0, %c0_1] : memref<1x4x342xf32, #tpu.memory_space<vmem>>, vector<1x4x288xf32>
    %1 = vector.shape_cast %0 : vector<1x4x288xf32> to vector<4x288xf32>
    %2 = arith.truncf %1 : vector<4x288xf32> to vector<4x288xbf16>
    %c0_2 = arith.constant 0 : index
    %c0_3 = arith.constant 0 : index
    %c0_4 = arith.constant 0 : index
    %3 = vector.load %arg2[%c0_2, %c0_3, %c0_4] : memref<9x8x4xbf16, #tpu.memory_space<vmem>>, vector<1x8x4xbf16>
    %4 = vector.shape_cast %3 : vector<1x8x4xbf16> to vector<8x4xbf16>
    %cst = arith.constant dense<0.000000e+00> : vector<8x288xf32>
    %5 = tpu.matmul %4, %2, %cst {dimension_numbers = #tpu.dot_dimension_numbers<[1], [0], [0], [1], [0, 0, 1, 1], [], []>} : vector<8x4xbf16>, vector<4x288xbf16>, vector<8x288xf32> -> vector<8x288xf32>
    %c0_5 = arith.constant 0 : index
    %c0_6 = arith.constant 0 : index
    %c1 = arith.constant 1 : index
    %6 = vector.load %arg1[%c0_5, %c0_6, %c1] : memref<1x4x342xf32, #tpu.memory_space<vmem>>, vector<1x4x288xf32>
    %7 = vector.shape_cast %6 : vector<1x4x288xf32> to vector<4x288xf32>
    %8 = arith.truncf %7 : vector<4x288xf32> to vector<4x288xbf16>
    %c1_7 = arith.constant 1 : index
    %c0_8 = arith.constant 0 : index
    %c0_9 = arith.constant 0 : index
    %9 = vector.load %arg2[%c1_7, %c0_8, %c0_9] : memref<9x8x4xbf16, #tpu.memory_space<vmem>>, vector<1x8x4xbf16>
    %10 = vector.shape_cast %9 : vector<1x8x4xbf16> to vector<8x4xbf16>
    %cst_10 = arith.constant dense<0.000000e+00> : vector<8x288xf32>
    %11 = tpu.matmul %10, %8, %cst_10 {dimension_numbers = #tpu.dot_dimension_numbers<[1], [0], [0], [1], [0, 0, 1, 1], [], []>} : vector<8x4xbf16>, vector<4x288xbf16>, vector<8x288xf32> -> vector<8x288xf32>
    %12 = arith.addf %5, %11 : vector<8x288xf32>
    %c0_11 = arith.constant 0 : index
    %c0_12 = arith.constant 0 : index
    %c2 = arith.constant 2 : index
    %13 = vector.load %arg1[%c0_11, %c0_12, %c2] : memref<1x4x342xf32, #tpu.memory_space<vmem>>, vector<1x4x288xf32>
    %14 = vector.shape_cast %13 : vector<1x4x288xf32> to vector<4x288xf32>
    %15 = arith.truncf %14 : vector<4x288xf32> to vector<4x288xbf16>
    %c2_13 = arith.constant 2 : index
    %c0_14 = arith.constant 0 : index
    %c0_15 = arith.constant 0 : index
    %16 = vector.load %arg2[%c2_13, %c0_14, %c0_15] : memref<9x8x4xbf16, #tpu.memory_space<vmem>>, vector<1x8x4xbf16>
    %17 = vector.shape_cast %16 : vector<1x8x4xbf16> to vector<8x4xbf16>
    %cst_16 = arith.constant dense<0.000000e+00> : vector<8x288xf32>
    %18 = tpu.matmul %17, %15, %cst_16 {dimension_numbers = #tpu.dot_dimension_numbers<[1], [0], [0], [1], [0, 0, 1, 1], [], []>} : vector<8x4xbf16>, vector<4x288xbf16>, vector<8x288xf32> -> vector<8x288xf32>
    %19 = arith.addf %12, %18 : vector<8x288xf32>
    %c0_17 = arith.constant 0 : index
    %c0_18 = arith.constant 0 : index
    %c18 = arith.constant 18 : index
    %20 = vector.load %arg1[%c0_17, %c0_18, %c18] : memref<1x4x342xf32, #tpu.memory_space<vmem>>, vector<1x4x288xf32>
    %21 = vector.shape_cast %20 : vector<1x4x288xf32> to vector<4x288xf32>
    %22 = arith.truncf %21 : vector<4x288xf32> to vector<4x288xbf16>
    %c3 = arith.constant 3 : index
    %c0_19 = arith.constant 0 : index
    %c0_20 = arith.constant 0 : index
    %23 = vector.load %arg2[%c3, %c0_19, %c0_20] : memref<9x8x4xbf16, #tpu.memory_space<vmem>>, vector<1x8x4xbf16>
    %24 = vector.shape_cast %23 : vector<1x8x4xbf16> to vector<8x4xbf16>
    %cst_21 = arith.constant dense<0.000000e+00> : vector<8x288xf32>
    %25 = tpu.matmul %24, %22, %cst_21 {dimension_numbers = #tpu.dot_dimension_numbers<[1], [0], [0], [1], [0, 0, 1, 1], [], []>} : vector<8x4xbf16>, vector<4x288xbf16>, vector<8x288xf32> -> vector<8x288xf32>
    %26 = arith.addf %19, %25 : vector<8x288xf32>
    %c0_22 = arith.constant 0 : index
    %c0_23 = arith.constant 0 : index
    %c19 = arith.constant 19 : index
    %27 = vector.load %arg1[%c0_22, %c0_23, %c19] : memref<1x4x342xf32, #tpu.memory_space<vmem>>, vector<1x4x288xf32>
    %28 = vector.shape_cast %27 : vector<1x4x288xf32> to vector<4x288xf32>
    %29 = arith.truncf %28 : vector<4x288xf32> to vector<4x288xbf16>
    %c4 = arith.constant 4 : index
    %c0_24 = arith.constant 0 : index
    %c0_25 = arith.constant 0 : index
    %30 = vector.load %arg2[%c4, %c0_24, %c0_25] : memref<9x8x4xbf16, #tpu.memory_space<vmem>>, vector<1x8x4xbf16>
    %31 = vector.shape_cast %30 : vector<1x8x4xbf16> to vector<8x4xbf16>
    %cst_26 = arith.constant dense<0.000000e+00> : vector<8x288xf32>
    %32 = tpu.matmul %31, %29, %cst_26 {dimension_numbers = #tpu.dot_dimension_numbers<[1], [0], [0], [1], [0, 0, 1, 1], [], []>} : vector<8x4xbf16>, vector<4x288xbf16>, vector<8x288xf32> -> vector<8x288xf32>
    %33 = arith.addf %26, %32 : vector<8x288xf32>
    %c0_27 = arith.constant 0 : index
    %c0_28 = arith.constant 0 : index
    %c20 = arith.constant 20 : index
    %34 = vector.load %arg1[%c0_27, %c0_28, %c20] : memref<1x4x342xf32, #tpu.memory_space<vmem>>, vector<1x4x288xf32>
    %35 = vector.shape_cast %34 : vector<1x4x288xf32> to vector<4x288xf32>
    %36 = arith.truncf %35 : vector<4x288xf32> to vector<4x288xbf16>
    %c5 = arith.constant 5 : index
    %c0_29 = arith.constant 0 : index
    %c0_30 = arith.constant 0 : index
    %37 = vector.load %arg2[%c5, %c0_29, %c0_30] : memref<9x8x4xbf16, #tpu.memory_space<vmem>>, vector<1x8x4xbf16>
    %38 = vector.shape_cast %37 : vector<1x8x4xbf16> to vector<8x4xbf16>
    %cst_31 = arith.constant dense<0.000000e+00> : vector<8x288xf32>
    %39 = tpu.matmul %38, %36, %cst_31 {dimension_numbers = #tpu.dot_dimension_numbers<[1], [0], [0], [1], [0, 0, 1, 1], [], []>} : vector<8x4xbf16>, vector<4x288xbf16>, vector<8x288xf32> -> vector<8x288xf32>
    %40 = arith.addf %33, %39 : vector<8x288xf32>
    %c0_32 = arith.constant 0 : index
    %c0_33 = arith.constant 0 : index
    %c36 = arith.constant 36 : index
    %41 = vector.load %arg1[%c0_32, %c0_33, %c36] : memref<1x4x342xf32, #tpu.memory_space<vmem>>, vector<1x4x288xf32>
    %42 = vector.shape_cast %41 : vector<1x4x288xf32> to vector<4x288xf32>
    %43 = arith.truncf %42 : vector<4x288xf32> to vector<4x288xbf16>
    %c6 = arith.constant 6 : index
    %c0_34 = arith.constant 0 : index
    %c0_35 = arith.constant 0 : index
    %44 = vector.load %arg2[%c6, %c0_34, %c0_35] : memref<9x8x4xbf16, #tpu.memory_space<vmem>>, vector<1x8x4xbf16>
    %45 = vector.shape_cast %44 : vector<1x8x4xbf16> to vector<8x4xbf16>
    %cst_36 = arith.constant dense<0.000000e+00> : vector<8x288xf32>
    %46 = tpu.matmul %45, %43, %cst_36 {dimension_numbers = #tpu.dot_dimension_numbers<[1], [0], [0], [1], [0, 0, 1, 1], [], []>} : vector<8x4xbf16>, vector<4x288xbf16>, vector<8x288xf32> -> vector<8x288xf32>
    %47 = arith.addf %40, %46 : vector<8x288xf32>
    %c0_37 = arith.constant 0 : index
    %c0_38 = arith.constant 0 : index
    %c37 = arith.constant 37 : index
    %48 = vector.load %arg1[%c0_37, %c0_38, %c37] : memref<1x4x342xf32, #tpu.memory_space<vmem>>, vector<1x4x288xf32>
    %49 = vector.shape_cast %48 : vector<1x4x288xf32> to vector<4x288xf32>
    %50 = arith.truncf %49 : vector<4x288xf32> to vector<4x288xbf16>
    %c7 = arith.constant 7 : index
    %c0_39 = arith.constant 0 : index
    %c0_40 = arith.constant 0 : index
    %51 = vector.load %arg2[%c7, %c0_39, %c0_40] : memref<9x8x4xbf16, #tpu.memory_space<vmem>>, vector<1x8x4xbf16>
    %52 = vector.shape_cast %51 : vector<1x8x4xbf16> to vector<8x4xbf16>
    %cst_41 = arith.constant dense<0.000000e+00> : vector<8x288xf32>
    %53 = tpu.matmul %52, %50, %cst_41 {dimension_numbers = #tpu.dot_dimension_numbers<[1], [0], [0], [1], [0, 0, 1, 1], [], []>} : vector<8x4xbf16>, vector<4x288xbf16>, vector<8x288xf32> -> vector<8x288xf32>
    %54 = arith.addf %47, %53 : vector<8x288xf32>
    %c0_42 = arith.constant 0 : index
    %c0_43 = arith.constant 0 : index
    %c38 = arith.constant 38 : index
    %55 = vector.load %arg1[%c0_42, %c0_43, %c38] : memref<1x4x342xf32, #tpu.memory_space<vmem>>, vector<1x4x288xf32>
    %56 = vector.shape_cast %55 : vector<1x4x288xf32> to vector<4x288xf32>
    %57 = arith.truncf %56 : vector<4x288xf32> to vector<4x288xbf16>
    %c8 = arith.constant 8 : index
    %c0_44 = arith.constant 0 : index
    %c0_45 = arith.constant 0 : index
    %58 = vector.load %arg2[%c8, %c0_44, %c0_45] : memref<9x8x4xbf16, #tpu.memory_space<vmem>>, vector<1x8x4xbf16>
    %59 = vector.shape_cast %58 : vector<1x8x4xbf16> to vector<8x4xbf16>
    %cst_46 = arith.constant dense<0.000000e+00> : vector<8x288xf32>
    %60 = tpu.matmul %59, %57, %cst_46 {dimension_numbers = #tpu.dot_dimension_numbers<[1], [0], [0], [1], [0, 0, 1, 1], [], []>} : vector<8x4xbf16>, vector<4x288xbf16>, vector<8x288xf32> -> vector<8x288xf32>
    %61 = arith.addf %54, %60 : vector<8x288xf32>
    %c0_47 = arith.constant 0 : index
    %c0_48 = arith.constant 0 : index
    %62 = vector.load %arg3[%c0_47, %c0_48] : memref<8x1xf32, #tpu.memory_space<vmem>>, vector<8x1xf32>
    %63 = vector.broadcast %62 : vector<8x1xf32> to vector<8x288xf32>
    %64 = arith.addf %61, %63 : vector<8x288xf32>
    %cst_49 = arith.constant 0.000000e+00 : f32
    %65 = vector.broadcast %cst_49 : f32 to vector<8x288xf32>
    %66 = arith.maximumf %64, %65 : vector<8x288xf32>
    %c0_50 = arith.constant 0 : index
    %c0_51 = arith.constant 0 : index
    %c0_52 = arith.constant 0 : index
    %67 = vector.load %arg4[%c0_50, %c0_51, %c0_52] : memref<4x288x64xf32, #tpu.memory_space<vmem>>, vector<1x288x64xf32>
    %68 = vector.shape_cast %67 : vector<1x288x64xf32> to vector<288x64xf32>
    %cst_53 = arith.constant dense<0.000000e+00> : vector<8x64xf32>
    %69 = tpu.matmul %66, %68, %cst_53 {dimension_numbers = #tpu.dot_dimension_numbers<[1], [0], [0], [1], [0, 0, 1, 1], [], []>} : vector<8x288xf32>, vector<288x64xf32>, vector<8x64xf32> -> vector<8x64xf32>
    %c1_54 = arith.constant 1 : index
    %c0_55 = arith.constant 0 : index
    %c0_56 = arith.constant 0 : index
    %70 = vector.load %arg4[%c1_54, %c0_55, %c0_56] : memref<4x288x64xf32, #tpu.memory_space<vmem>>, vector<1x288x64xf32>
    %71 = vector.shape_cast %70 : vector<1x288x64xf32> to vector<288x64xf32>
    %cst_57 = arith.constant dense<0.000000e+00> : vector<8x64xf32>
    %72 = tpu.matmul %66, %71, %cst_57 {dimension_numbers = #tpu.dot_dimension_numbers<[1], [0], [0], [1], [0, 0, 1, 1], [], []>} : vector<8x288xf32>, vector<288x64xf32>, vector<8x64xf32> -> vector<8x64xf32>
    %73 = arith.maximumf %69, %72 : vector<8x64xf32>
    %c2_58 = arith.constant 2 : index
    %c0_59 = arith.constant 0 : index
    %c0_60 = arith.constant 0 : index
    %74 = vector.load %arg4[%c2_58, %c0_59, %c0_60] : memref<4x288x64xf32, #tpu.memory_space<vmem>>, vector<1x288x64xf32>
    %75 = vector.shape_cast %74 : vector<1x288x64xf32> to vector<288x64xf32>
    %cst_61 = arith.constant dense<0.000000e+00> : vector<8x64xf32>
    %76 = tpu.matmul %66, %75, %cst_61 {dimension_numbers = #tpu.dot_dimension_numbers<[1], [0], [0], [1], [0, 0, 1, 1], [], []>} : vector<8x288xf32>, vector<288x64xf32>, vector<8x64xf32> -> vector<8x64xf32>
    %77 = arith.maximumf %73, %76 : vector<8x64xf32>
    %c3_62 = arith.constant 3 : index
    %c0_63 = arith.constant 0 : index
    %c0_64 = arith.constant 0 : index
    %78 = vector.load %arg4[%c3_62, %c0_63, %c0_64] : memref<4x288x64xf32, #tpu.memory_space<vmem>>, vector<1x288x64xf32>
    %79 = vector.shape_cast %78 : vector<1x288x64xf32> to vector<288x64xf32>
    %cst_65 = arith.constant dense<0.000000e+00> : vector<8x64xf32>
    %80 = tpu.matmul %66, %79, %cst_65 {dimension_numbers = #tpu.dot_dimension_numbers<[1], [0], [0], [1], [0, 0, 1, 1], [], []>} : vector<8x288xf32>, vector<288x64xf32>, vector<8x64xf32> -> vector<8x64xf32>
    %81 = arith.maximumf %77, %80 : vector<8x64xf32>
    %c0_66 = arith.constant 0 : index
    %c0_67 = arith.constant 0 : index
    %c0_68 = arith.constant 0 : index
    %82 = vector.load %arg7[%c0_66, %c0_67, %c0_68] : memref<1x8x64xf32, #tpu.memory_space<vmem>>, vector<1x8x64xf32>
    %83 = vector.shape_cast %82 : vector<1x8x64xf32> to vector<8x64xf32>
    %84 = vector.shape_cast %81 : vector<8x64xf32> to vector<1x8x64xf32>
    tpu.vector_store %arg7[%c0_66, %c0_67, %c0_68], %84 {strides = array<i32>} : memref<1x8x64xf32, #tpu.memory_space<vmem>>, vector<1x8x64xf32>,
    %c0_69 = arith.constant 0 : index
    %c0_70 = arith.constant 0 : index
    %85 = vector.load %arg6[%c0_69, %c0_70] : memref<1x10xf32, #tpu.memory_space<vmem>>, vector<1x10xf32>
    %86 = vector.extract_strided_slice %81 {offsets = [0, 0], sizes = [1, 64], strides = [1, 1]} : vector<8x64xf32> to vector<1x64xf32>
    %87 = arith.truncf %86 : vector<1x64xf32> to vector<1x64xbf16>
    %c0_71 = arith.constant 0 : index
    %c0_72 = arith.constant 0 : index
    %c0_73 = arith.constant 0 : index
    %88 = vector.load %arg5[%c0_71, %c0_72, %c0_73] : memref<8x64x10xbf16, #tpu.memory_space<vmem>>, vector<1x64x10xbf16>
    %89 = vector.shape_cast %88 : vector<1x64x10xbf16> to vector<64x10xbf16>
    %cst_74 = arith.constant dense<0.000000e+00> : vector<1x10xf32>
    %90 = tpu.matmul %87, %89, %cst_74 {dimension_numbers = #tpu.dot_dimension_numbers<[1], [0], [0], [1], [0, 0, 1, 1], [], []>} : vector<1x64xbf16>, vector<64x10xbf16>, vector<1x10xf32> -> vector<1x10xf32>
    %91 = arith.addf %85, %90 : vector<1x10xf32>
    %92 = vector.extract_strided_slice %81 {offsets = [1, 0], sizes = [1, 64], strides = [1, 1]} : vector<8x64xf32> to vector<1x64xf32>
    %93 = arith.truncf %92 : vector<1x64xf32> to vector<1x64xbf16>
    %c1_75 = arith.constant 1 : index
    %c0_76 = arith.constant 0 : index
    %c0_77 = arith.constant 0 : index
    %94 = vector.load %arg5[%c1_75, %c0_76, %c0_77] : memref<8x64x10xbf16, #tpu.memory_space<vmem>>, vector<1x64x10xbf16>
    %95 = vector.shape_cast %94 : vector<1x64x10xbf16> to vector<64x10xbf16>
    %cst_78 = arith.constant dense<0.000000e+00> : vector<1x10xf32>
    %96 = tpu.matmul %93, %95, %cst_78 {dimension_numbers = #tpu.dot_dimension_numbers<[1], [0], [0], [1], [0, 0, 1, 1], [], []>} : vector<1x64xbf16>, vector<64x10xbf16>, vector<1x10xf32> -> vector<1x10xf32>
    %97 = arith.addf %91, %96 : vector<1x10xf32>
    %98 = vector.extract_strided_slice %81 {offsets = [2, 0], sizes = [1, 64], strides = [1, 1]} : vector<8x64xf32> to vector<1x64xf32>
    %99 = arith.truncf %98 : vector<1x64xf32> to vector<1x64xbf16>
    %c2_79 = arith.constant 2 : index
    %c0_80 = arith.constant 0 : index
    %c0_81 = arith.constant 0 : index
    %100 = vector.load %arg5[%c2_79, %c0_80, %c0_81] : memref<8x64x10xbf16, #tpu.memory_space<vmem>>, vector<1x64x10xbf16>
    %101 = vector.shape_cast %100 : vector<1x64x10xbf16> to vector<64x10xbf16>
    %cst_82 = arith.constant dense<0.000000e+00> : vector<1x10xf32>
    %102 = tpu.matmul %99, %101, %cst_82 {dimension_numbers = #tpu.dot_dimension_numbers<[1], [0], [0], [1], [0, 0, 1, 1], [], []>} : vector<1x64xbf16>, vector<64x10xbf16>, vector<1x10xf32> -> vector<1x10xf32>
    %103 = arith.addf %97, %102 : vector<1x10xf32>
    %104 = vector.extract_strided_slice %81 {offsets = [3, 0], sizes = [1, 64], strides = [1, 1]} : vector<8x64xf32> to vector<1x64xf32>
    %105 = arith.truncf %104 : vector<1x64xf32> to vector<1x64xbf16>
    %c3_83 = arith.constant 3 : index
    %c0_84 = arith.constant 0 : index
    %c0_85 = arith.constant 0 : index
    %106 = vector.load %arg5[%c3_83, %c0_84, %c0_85] : memref<8x64x10xbf16, #tpu.memory_space<vmem>>, vector<1x64x10xbf16>
    %107 = vector.shape_cast %106 : vector<1x64x10xbf16> to vector<64x10xbf16>
    %cst_86 = arith.constant dense<0.000000e+00> : vector<1x10xf32>
    %108 = tpu.matmul %105, %107, %cst_86 {dimension_numbers = #tpu.dot_dimension_numbers<[1], [0], [0], [1], [0, 0, 1, 1], [], []>} : vector<1x64xbf16>, vector<64x10xbf16>, vector<1x10xf32> -> vector<1x10xf32>
    %109 = arith.addf %103, %108 : vector<1x10xf32>
    %110 = vector.extract_strided_slice %81 {offsets = [4, 0], sizes = [1, 64], strides = [1, 1]} : vector<8x64xf32> to vector<1x64xf32>
    %111 = arith.truncf %110 : vector<1x64xf32> to vector<1x64xbf16>
    %c4_87 = arith.constant 4 : index
    %c0_88 = arith.constant 0 : index
    %c0_89 = arith.constant 0 : index
    %112 = vector.load %arg5[%c4_87, %c0_88, %c0_89] : memref<8x64x10xbf16, #tpu.memory_space<vmem>>, vector<1x64x10xbf16>
    %113 = vector.shape_cast %112 : vector<1x64x10xbf16> to vector<64x10xbf16>
    %cst_90 = arith.constant dense<0.000000e+00> : vector<1x10xf32>
    %114 = tpu.matmul %111, %113, %cst_90 {dimension_numbers = #tpu.dot_dimension_numbers<[1], [0], [0], [1], [0, 0, 1, 1], [], []>} : vector<1x64xbf16>, vector<64x10xbf16>, vector<1x10xf32> -> vector<1x10xf32>
    %115 = arith.addf %109, %114 : vector<1x10xf32>
    %116 = vector.extract_strided_slice %81 {offsets = [5, 0], sizes = [1, 64], strides = [1, 1]} : vector<8x64xf32> to vector<1x64xf32>
    %117 = arith.truncf %116 : vector<1x64xf32> to vector<1x64xbf16>
    %c5_91 = arith.constant 5 : index
    %c0_92 = arith.constant 0 : index
    %c0_93 = arith.constant 0 : index
    %118 = vector.load %arg5[%c5_91, %c0_92, %c0_93] : memref<8x64x10xbf16, #tpu.memory_space<vmem>>, vector<1x64x10xbf16>
    %119 = vector.shape_cast %118 : vector<1x64x10xbf16> to vector<64x10xbf16>
    %cst_94 = arith.constant dense<0.000000e+00> : vector<1x10xf32>
    %120 = tpu.matmul %117, %119, %cst_94 {dimension_numbers = #tpu.dot_dimension_numbers<[1], [0], [0], [1], [0, 0, 1, 1], [], []>} : vector<1x64xbf16>, vector<64x10xbf16>, vector<1x10xf32> -> vector<1x10xf32>
    %121 = arith.addf %115, %120 : vector<1x10xf32>
    %122 = vector.extract_strided_slice %81 {offsets = [6, 0], sizes = [1, 64], strides = [1, 1]} : vector<8x64xf32> to vector<1x64xf32>
    %123 = arith.truncf %122 : vector<1x64xf32> to vector<1x64xbf16>
    %c6_95 = arith.constant 6 : index
    %c0_96 = arith.constant 0 : index
    %c0_97 = arith.constant 0 : index
    %124 = vector.load %arg5[%c6_95, %c0_96, %c0_97] : memref<8x64x10xbf16, #tpu.memory_space<vmem>>, vector<1x64x10xbf16>
    %125 = vector.shape_cast %124 : vector<1x64x10xbf16> to vector<64x10xbf16>
    %cst_98 = arith.constant dense<0.000000e+00> : vector<1x10xf32>
    %126 = tpu.matmul %123, %125, %cst_98 {dimension_numbers = #tpu.dot_dimension_numbers<[1], [0], [0], [1], [0, 0, 1, 1], [], []>} : vector<1x64xbf16>, vector<64x10xbf16>, vector<1x10xf32> -> vector<1x10xf32>
    %127 = arith.addf %121, %126 : vector<1x10xf32>
    %128 = vector.extract_strided_slice %81 {offsets = [7, 0], sizes = [1, 64], strides = [1, 1]} : vector<8x64xf32> to vector<1x64xf32>
    %129 = arith.truncf %128 : vector<1x64xf32> to vector<1x64xbf16>
    %c7_99 = arith.constant 7 : index
    %c0_100 = arith.constant 0 : index
    %c0_101 = arith.constant 0 : index
    %130 = vector.load %arg5[%c7_99, %c0_100, %c0_101] : memref<8x64x10xbf16, #tpu.memory_space<vmem>>, vector<1x64x10xbf16>
    %131 = vector.shape_cast %130 : vector<1x64x10xbf16> to vector<64x10xbf16>
    %cst_102 = arith.constant dense<0.000000e+00> : vector<1x10xf32>
    %132 = tpu.matmul %129, %131, %cst_102 {dimension_numbers = #tpu.dot_dimension_numbers<[1], [0], [0], [1], [0, 0, 1, 1], [], []>} : vector<1x64xbf16>, vector<64x10xbf16>, vector<1x10xf32> -> vector<1x10xf32>
    %133 = arith.addf %127, %132 : vector<1x10xf32>
    %c0_103 = arith.constant 0 : index
    %c0_104 = arith.constant 0 : index
    %c0_105 = arith.constant 0 : index
    %134 = vector.load %arg8[%c0_103, %c0_104, %c0_105] : memref<1x1x10xf32, #tpu.memory_space<vmem>>, vector<1x1x10xf32>
    %135 = vector.shape_cast %134 : vector<1x1x10xf32> to vector<1x10xf32>
    %136 = vector.shape_cast %133 : vector<1x10xf32> to vector<1x1x10xf32>
    tpu.vector_store %arg8[%c0_103, %c0_104, %c0_105], %136 {strides = array<i32>} : memref<1x1x10xf32, #tpu.memory_space<vmem>>, vector<1x1x10xf32>,
    return
  }
  func.func @transform_0(%arg0: i32) -> (i32, i32, i32) {
    %c0_i32 = arith.constant 0 : i32
    %c0_i32_0 = arith.constant 0 : i32
    %c0_i32_1 = arith.constant 0 : i32
    return %arg0, %c0_i32, %c0_i32_0 : i32, i32, i32
  }
  func.func @transform_1(%arg0: i32) -> (i32, i32, i32) {
    %c0_i32 = arith.constant 0 : i32
    %c0_i32_0 = arith.constant 0 : i32
    %c0_i32_1 = arith.constant 0 : i32
    %c0_i32_2 = arith.constant 0 : i32
    return %c0_i32, %c0_i32_0, %c0_i32_1 : i32, i32, i32
  }
  func.func @transform_2(%arg0: i32) -> (i32, i32) {
    %c0_i32 = arith.constant 0 : i32
    %c0_i32_0 = arith.constant 0 : i32
    %c0_i32_1 = arith.constant 0 : i32
    return %c0_i32, %c0_i32_0 : i32, i32
  }
  func.func @transform_3(%arg0: i32) -> (i32, i32, i32) {
    %c0_i32 = arith.constant 0 : i32
    %c0_i32_0 = arith.constant 0 : i32
    %c0_i32_1 = arith.constant 0 : i32
    %c0_i32_2 = arith.constant 0 : i32
    return %c0_i32, %c0_i32_0, %c0_i32_1 : i32, i32, i32
  }
  func.func @transform_4(%arg0: i32) -> (i32, i32, i32) {
    %c0_i32 = arith.constant 0 : i32
    %c0_i32_0 = arith.constant 0 : i32
    %c0_i32_1 = arith.constant 0 : i32
    %c0_i32_2 = arith.constant 0 : i32
    return %c0_i32, %c0_i32_0, %c0_i32_1 : i32, i32, i32
  }
  func.func @transform_5(%arg0: i32) -> (i32, i32) {
    %c0_i32 = arith.constant 0 : i32
    %c0_i32_0 = arith.constant 0 : i32
    %c0_i32_1 = arith.constant 0 : i32
    return %c0_i32, %c0_i32_0 : i32, i32
  }
  func.func @transform_6(%arg0: i32) -> (i32, i32, i32) {
    %c0_i32 = arith.constant 0 : i32
    %c0_i32_0 = arith.constant 0 : i32
    %c0_i32_1 = arith.constant 0 : i32
    return %arg0, %c0_i32, %c0_i32_0 : i32, i32, i32
  }
  func.func @transform_7(%arg0: i32) -> (i32, i32, i32) {
    %c0_i32 = arith.constant 0 : i32
    %c0_i32_0 = arith.constant 0 : i32
    %c0_i32_1 = arith.constant 0 : i32
    return %arg0, %c0_i32, %c0_i32_0 : i32, i32, i32
  }
}

</mosaic_0001>

<llo_original>
// kernel: forward.1
$region0: #{forward.1}
  #allocation0 [shape = 'u32[]', space=smem, size = 0x4, offset = 0x4, fixed_abs, tag = 'smem constant byte address 0x4 - core index']
  #allocation1 [shape = 'u32[144,128]{1,0:T(1,128)}', space=vmem, size = 0x12000, scoped, tag = 'internal scratch']
  %s0 = inlined_call_operand.vmem [shape: f32[2,4,342], index: 0, kind: input, shape index: {}]
  %s1 = inlined_call_operand.vmem [shape: bf16[9,8,4], index: 1, kind: input, shape index: {}]
  %s2 = inlined_call_operand.vmem [shape: f32[8,1], index: 2, kind: input, shape index: {}]
  %s3 = inlined_call_operand.vmem [shape: f32[4,288,64], index: 3, kind: input, shape index: {}]
  %s4 = inlined_call_operand.vmem [shape: bf16[8,64,10], index: 4, kind: input, shape index: {}]
  %s5 = inlined_call_operand.vmem [shape: f32[1,10], index: 5, kind: input, shape index: {}]
  %s6 = inlined_call_operand.vmem [shape: f32[2,8,64], index: 6, kind: output, shape index: {0}]
  %s7 = inlined_call_operand.hbm [shape: f32[2,1,10], index: 7, kind: output, shape index: {1}]
  %8 = xla_tuple %s6, %s7
  %s9 = sld [smem:[#allocation0]]
  $region65: #{forward.1} parent=0
    _
  %s11 = ssub.s32 1, %s9
  %s12 = scalar_select 0, %s11, %s9
  $region1: #{forward.1} parent=0
    #allocation2 [shape = 'u8[1024]{0}', space=vmem, size = 0x400, scoped, tag = 'output window, operand 1']
    #allocation3 [shape = 's32[2]{0}', space=sflag, size = 0x8, scoped, tag = 'scoped memory for forward.1']
    %13 = vsyncpa [#allocation3], 0
    %s14 = scalar_lea.sflag [#allocation3], 1
    %15 = vsyncpa %s14, 0
    loop: start=0, step=1, limit=4
    $region2: #{forward.1} parent=1 // loop_pre_header
      _
    $region3: #{forward.1} parent=1 // loop_header
      %s17 = sphi 0, %s21
      %p18 = scmp.ge.s32.totalorder %s17, 4
      %s27 = sphi 0, %s29
      %s30 = sphi 0, %s27
      %s31 = sphi 0, %s30
      %s47 = sphi 0, %s31
      %s51 = sphi 0, %s51
      %s53 = sphi 0, %s51
      %s54 = sphi 0, %s53
      %s68 = sphi 0, %s54
      %s72 = sphi 0, %s72
      %s74 = sphi 0, %s72
      %s75 = sphi 0, %s74
      %s89 = sphi 0, %s75
      %s93 = sphi 0, %s93
      %s95 = sphi 0, %s93
      %s96 = sphi 0, %s95
      %s110 = sphi 0, %s96
      %s114 = sphi 0, %s114
      %s116 = sphi 0, %s114
      %s117 = sphi 0, %s116
      %s131 = sphi 0, %s117
      %s135 = sphi 0, %s135
      %s137 = sphi 0, %s135
      %s138 = sphi 0, %s137
      %s152 = sphi 0, %s138
      %s158 = sphi 0, %s160
      %s161 = sphi 0, %s158
      %s162 = sphi 0, %s161
      %s178 = sphi 0, %s162
      %s184 = sphi 0, %s186
      %s187 = sphi 0, %s184
      %s188 = sphi 0, %s187
      %s204 = sphi 0, %s188
    $region4: #{forward.1} parent=1 // loop_header_branch
      %20 = sbr.rel (%p18) target = $region8
    $region5: #{forward.1} parent=1 // loop_body
      %s22 = ssub.s32 %s17, 1
      %s23 = ssub.s32 %s17, 2
      %s24 = sadd.s32 %s17, 1
      %s25 = ssub.s32 %s17, %s24
      %p26 = scmp.eq.s32.totalorder %s25, 0
      %s28 = sadd.s32 %s27, 1
      %s29 = scalar_select %p26, %s27, %s28
      %p32 = pneg %p26
      %p33 = scmp.eq.s32.totalorder %s17, 1
      %p34 = por %p32, %p33
      %p35 = scmp.ne.s32.totalorder %s27, %s30
      %p36 = scmp.eq.s32.totalorder %s17, 0
      %p37 = por %p35, %p36
      %p38 = scmp.ne.s32.totalorder %s27, %s30
      %p39 = scmp.eq.s32.totalorder %s22, 1
      %p40 = por %p38, %p39
      %p41 = scmp.ne.s32.totalorder %s30, %s31
      %p42 = scmp.eq.s32.totalorder %s22, 0
      %p43 = por %p41, %p42
      %p44 = scmp.ne.s32.totalorder %s30, %s31
      %p45 = scmp.eq.s32.totalorder %s23, 1
      %p46 = por %p44, %p45
      %p48 = scmp.ne.s32.totalorder %s31, %s47
      %p49 = scmp.eq.s32.totalorder %s23, 0
      %p50 = por %p48, %p49
      %s52 = sadd.s32 %s51, 1
      %p55 = scmp.eq.s32.totalorder %s17, 1
      %p56 = scmp.ne.s32.totalorder %s51, %s53
      %p57 = scmp.eq.s32.totalorder %s17, 0
      %p58 = por %p56, %p57
      %p59 = scmp.ne.s32.totalorder %s51, %s53
      %p60 = scmp.eq.s32.totalorder %s22, 1
      %p61 = por %p59, %p60
      %p62 = scmp.ne.s32.totalorder %s53, %s54
      %p63 = scmp.eq.s32.totalorder %s22, 0
      %p64 = por %p62, %p63
      %p65 = scmp.ne.s32.totalorder %s53, %s54
      %p66 = scmp.eq.s32.totalorder %s23, 1
      %p67 = por %p65, %p66
      %p69 = scmp.ne.s32.totalorder %s54, %s68
      %p70 = scmp.eq.s32.totalorder %s23, 0
      %p71 = por %p69, %p70
      %s73 = sadd.s32 %s72, 1
      %p76 = scmp.eq.s32.totalorder %s17, 1
      %p77 = scmp.ne.s32.totalorder %s72, %s74
      %p78 = scmp.eq.s32.totalorder %s17, 0
      %p79 = por %p77, %p78
      %p80 = scmp.ne.s32.totalorder %s72, %s74
      %p81 = scmp.eq.s32.totalorder %s22, 1
      %p82 = por %p80, %p81
      %p83 = scmp.ne.s32.totalorder %s74, %s75
      %p84 = scmp.eq.s32.totalorder %s22, 0
      %p85 = por %p83, %p84
      %p86 = scmp.ne.s32.totalorder %s74, %s75
      %p87 = scmp.eq.s32.totalorder %s23, 1
      %p88 = por %p86, %p87
      %p90 = scmp.ne.s32.totalorder %s75, %s89
      %p91 = scmp.eq.s32.totalorder %s23, 0
      %p92 = por %p90, %p91
      %s94 = sadd.s32 %s93, 1
      %p97 = scmp.eq.s32.totalorder %s17, 1
      %p98 = scmp.ne.s32.totalorder %s93, %s95
      %p99 = scmp.eq.s32.totalorder %s17, 0
      %p100 = por %p98, %p99
      %p101 = scmp.ne.s32.totalorder %s93, %s95
      %p102 = scmp.eq.s32.totalorder %s22, 1
      %p103 = por %p101, %p102
      %p104 = scmp.ne.s32.totalorder %s95, %s96
      %p105 = scmp.eq.s32.totalorder %s22, 0
      %p106 = por %p104, %p105
      %p107 = scmp.ne.s32.totalorder %s95, %s96
      %p108 = scmp.eq.s32.totalorder %s23, 1
      %p109 = por %p107, %p108
      %p111 = scmp.ne.s32.totalorder %s96, %s110
      %p112 = scmp.eq.s32.totalorder %s23, 0
      %p113 = por %p111, %p112
      %s115 = sadd.s32 %s114, 1
      %p118 = scmp.eq.s32.totalorder %s17, 1
      %p119 = scmp.ne.s32.totalorder %s114, %s116
      %p120 = scmp.eq.s32.totalorder %s17, 0
      %p121 = por %p119, %p120
      %p122 = scmp.ne.s32.totalorder %s114, %s116
      %p123 = scmp.eq.s32.totalorder %s22, 1
      %p124 = por %p122, %p123
      %p125 = scmp.ne.s32.totalorder %s116, %s117
      %p126 = scmp.eq.s32.totalorder %s22, 0
      %p127 = por %p125, %p126
      %p128 = scmp.ne.s32.totalorder %s116, %s117
      %p129 = scmp.eq.s32.totalorder %s23, 1
      %p130 = por %p128, %p129
      %p132 = scmp.ne.s32.totalorder %s117, %s131
      %p133 = scmp.eq.s32.totalorder %s23, 0
      %p134 = por %p132, %p133
      %s136 = sadd.s32 %s135, 1
      %p139 = scmp.eq.s32.totalorder %s17, 1
      %p140 = scmp.ne.s32.totalorder %s135, %s137
      %p141 = scmp.eq.s32.totalorder %s17, 0
      %p142 = por %p140, %p141
      %p143 = scmp.ne.s32.totalorder %s135, %s137
      %p144 = scmp.eq.s32.totalorder %s22, 1
      %p145 = por %p143, %p144
      %p146 = scmp.ne.s32.totalorder %s137, %s138
      %p147 = scmp.eq.s32.totalorder %s22, 0
      %p148 = por %p146, %p147
      %p149 = scmp.ne.s32.totalorder %s137, %s138
      %p150 = scmp.eq.s32.totalorder %s23, 1
      %p151 = por %p149, %p150
      %p153 = scmp.ne.s32.totalorder %s138, %s152
      %p154 = scmp.eq.s32.totalorder %s23, 0
      %p155 = por %p153, %p154
      %s156 = ssub.s32 %s17, %s24
      %p157 = scmp.eq.s32.totalorder %s156, 0
      %s159 = sadd.s32 %s158, 1
      %s160 = scalar_select %p157, %s158, %s159
      %p163 = pneg %p157
      %p164 = scmp.eq.s32.totalorder %s17, 1
      %p165 = por %p163, %p164
      %p166 = scmp.ne.s32.totalorder %s158, %s161
      %p167 = scmp.eq.s32.totalorder %s17, 0
      %p168 = por %p166, %p167
      %p169 = scmp.ne.s32.totalorder %s158, %s161
      %p170 = scmp.eq.s32.totalorder %s22, 1
      %p171 = por %p169, %p170
      %p172 = scmp.ne.s32.totalorder %s161, %s162
      %p173 = scmp.eq.s32.totalorder %s22, 0
      %p174 = por %p172, %p173
      %p175 = scmp.ne.s32.totalorder %s161, %s162
      %p176 = scmp.eq.s32.totalorder %s23, 1
      %p177 = por %p175, %p176
      %p179 = scmp.ne.s32.totalorder %s162, %s178
      %p180 = scmp.eq.s32.totalorder %s23, 0
      %p181 = por %p179, %p180
      %s182 = ssub.s32 %s17, %s24
      %p183 = scmp.eq.s32.totalorder %s182, 0
      %s185 = sadd.s32 %s184, 1
      %s186 = scalar_select %p183, %s184, %s185
      %p189 = pneg %p183
      %p190 = scmp.eq.s32.totalorder %s17, 1
      %p191 = por %p189, %p190
      %p192 = scmp.ne.s32.totalorder %s184, %s187
      %p193 = scmp.eq.s32.totalorder %s17, 0
      %p194 = por %p192, %p193
      %p195 = scmp.ne.s32.totalorder %s184, %s187
      %p196 = scmp.eq.s32.totalorder %s22, 1
      %p197 = por %p195, %p196
      %p198 = scmp.ne.s32.totalorder %s187, %s188
      %p199 = scmp.eq.s32.totalorder %s22, 0
      %p200 = por %p198, %p199
      %p201 = scmp.ne.s32.totalorder %s187, %s188
      %p202 = scmp.eq.s32.totalorder %s23, 1
      %p203 = por %p201, %p202
      %p205 = scmp.ne.s32.totalorder %s188, %s204
      %p206 = scmp.eq.s32.totalorder %s23, 0
      %p207 = por %p205, %p206
      %p208 = scmp.le.s32.totalorder 1, %s17
      %p209 = scmp.lt.s32.totalorder %s17, 3
      %p210 = pnand %p208, %p209
      %p211 = pneg %p210
      // Predicated region
      $region9: #{forward.1} parent=5 // pred_check
        _
      $region10: #{forward.1} parent=5 // pred_check_branch
        %213 = sbr.rel (%p210) target = $region12
      $region11: #{forward.1} parent=5 // pred_region
        %s214 = ssub.s32 %s17, 1
        // Predicated region
        $region13: #{forward.1} parent=11 // pred_check
          %p215 = pneg %p64
        $region14: #{forward.1} parent=11 // pred_check_branch
          %217 = sbr.rel (%p215) target = $region16
        $region15: #{forward.1} parent=11 // pred_region
          _
        $region16: #{forward.1} parent=11 // pred_fallthru
          _
        // Predicated region
        $region17: #{forward.1} parent=11 // pred_check
          %p218 = pneg %p85
        $region18: #{forward.1} parent=11 // pred_check_branch
          %220 = sbr.rel (%p218) target = $region20
        $region19: #{forward.1} parent=11 // pred_region
          _
        $region20: #{forward.1} parent=11 // pred_fallthru
          _
        // Predicated region
        $region21: #{forward.1} parent=11 // pred_check
          %p221 = pneg %p106
        $region22: #{forward.1} parent=11 // pred_check_branch
          %223 = sbr.rel (%p221) target = $region24
        $region23: #{forward.1} parent=11 // pred_region
          _
        $region24: #{forward.1} parent=11 // pred_fallthru
          _
        // Predicated region
        $region25: #{forward.1} parent=11 // pred_check
          %p224 = pneg %p127
        $region26: #{forward.1} parent=11 // pred_check_branch
          %226 = sbr.rel (%p224) target = $region28
        $region27: #{forward.1} parent=11 // pred_region
          _
        $region28: #{forward.1} parent=11 // pred_fallthru
          _
        // Predicated region
        $region29: #{forward.1} parent=11 // pred_check
          %p227 = pneg %p148
        $region30: #{forward.1} parent=11 // pred_check_branch
          %229 = sbr.rel (%p227) target = $region32
        $region31: #{forward.1} parent=11 // pred_region
          _
        $region32: #{forward.1} parent=11 // pred_fallthru
          _
      $region12: #{forward.1} parent=5 // pred_fallthru
        _
      %p230 = scmp.lt.s32.totalorder %s17, 2
      // Predicated region
      $region33: #{forward.1} parent=5 // pred_check
        %p231 = pneg %p230
      $region34: #{forward.1} parent=5 // pred_check_branch
        %233 = sbr.rel (%p231) target = $region36
      $region35: #{forward.1} parent=5 // pred_region
        // Predicated region
        $region37: #{forward.1} parent=35 // pred_check
          %p234 = pneg %p37
        $region38: #{forward.1} parent=35 // pred_check_branch
          %236 = sbr.rel (%p234) target = $region40
        $region39: #{forward.1} parent=35 // pred_region
          %p237 = scmp.lt.s32.totalorder %s17, 1
          %s238 = scalar_select %p237, %s17, 1
          %s239 = smul.addr %s238, 3
          %s240 = smul.addr %s239, 4
          %s241 = scalar_lea.vmem %s0, %s240
        $region40: #{forward.1} parent=35 // pred_fallthru
          _
      $region36: #{forward.1} parent=5 // pred_fallthru
        _
      %p242 = scmp.le.s32.totalorder 1, %s17
      %p243 = scmp.lt.s32.totalorder %s17, 3
      %p244 = pnand %p242, %p243
      %p245 = pneg %p244
      // Predicated region
      $region41: #{forward.1} parent=5 // pred_check
        _
      $region42: #{forward.1} parent=5 // pred_check_branch
        %247 = sbr.rel (%p244) target = $region44
      $region43: #{forward.1} parent=5 // pred_region
        %s248 = ssub.s32 %s17, 1
        %p249 = scmp.lt.s32.totalorder %s22, 1
        %s250 = scalar_select %p249, %s22, 1
        %s251 = smul.addr %s250, 3
        %s252 = smul.addr %s251, 4
        %s253 = scalar_lea.vmem %s0, %s252
        %p254 = pneg %p43
        %p255 = pneg %p40
        %p256 = pneg %p64
        %p257 = pneg %p61
        %p258 = pneg %p85
        %p259 = pneg %p82
        %p260 = pneg %p106
        %p261 = pneg %p103
        %p262 = pneg %p127
        %p263 = pneg %p124
        %p264 = pneg %p148
        %p265 = pneg %p145
        %p266 = pneg %p174
        %p267 = pneg %p171
        %p268 = scmp.lt.s32.totalorder %s22, 1
        %s269 = scalar_select %p268, %s22, 1
        %s270 = smul.addr %s269, 8
        %s271 = scalar_lea.vmem %s6, %s270
        %p272 = pneg %p200
        %p273 = pneg %p197
        %s274 = sand.u32 %s187, 1
        %s275 = scalar_lea.sflag [#allocation3], %s274
        %s276 = sand.u32 %s187, 1
        %s277 = scalar_lea.vmem [#allocation2], %s276
        %p278 = scmp.lt.s32.totalorder %s22, 1
        %s279 = scalar_select %p278, %s22, 1
        %s280 = smul.addr %s279, 3
        %s281 = smul.addr %s280, 4
        %s282 = scalar_lea.vmem %s0, %s281
        %p283 = scmp.lt.s32.totalorder %s22, 1
        %s284 = scalar_select %p283, %s22, 1
        %s285 = smul.addr %s284, 8
        %s286 = scalar_lea.vmem %s6, %s285
        %v288 = vld [vmem:[%s282] sm:$0xff]
        %v289 = vld [vmem:[%s282 + $0x8] sm:$0xf]
        %v291 = vcombine.high %v288, %v288
        %v293 = vpack.c.bf16 %v288, %v288
        %v294 = vpack.c.bf16 %v291, %v291
        %v295 = vpack.c.bf16 %v289, %v289
        %v296 = vld [vmem:[%s1] sm:$0xf]
        %s297 = scalar_lea.vmem %s1, 4
        %v298 = vld [vmem:[%s297] sm:$0xf]
        %302 = vrot.lane.b32.xlu0 %v293, 127
        %v303 = vpop.permute.xlu0 %302
        %304 = vrot.lane.b32.xlu0 %v294, 127
        %v305 = vpop.permute.xlu0 %304
        %306 = vrot.lane.b32.xlu0 %v295, 127
        %v307 = vpop.permute.xlu0 %306
        %vm308 = vcmask 1039360
        %v309 = vsel %vm308, %v303, %v305
        %v310 = vsel %vm308, %v305, %v307
        %vm311 = vcmask 31744
        %v313 = vsel %vm311, %v298, 0
        %vm315 = vcmask 1041408
        %v317 = vsel %vm315, %v309, 0
        %v320 = vsel %vm315, %v310, 0
        %v323 = vsel %vm315, %v307, 0
        %325 = vmatprep.subr.bf16.mxu0 0
        %326 = vmatpush1.bf16.msra.mxu0 0
        %327 = vmatprep.subr.bf16.mxu0 0
        %328 = vmatpush1.bf16.msra.mxu0 0
        %329 = vmatprep.subr.bf16.mxu0 0
        %330 = vmatpush1.bf16.msra.mxu0 0
        %331 = vmatprep.subr.bf16.mxu0 0
        %332 = vmatpush1.bf16.msra.mxu0 0
        %333 = vmatprep.subr.bf16.mxu0 0
        %334 = vmatpush1.bf16.msra.mxu0 0
        %335 = vmatprep.subr.bf16.mxu0 0
        %336 = vmatpush1.bf16.msra.mxu0 0
        %337 = vmatprep.subr.bf16.mxu0 0
        %338 = vmatpush1.bf16.msra.mxu0 0
        %339 = vmatprep.subr.bf16.mxu0 %v320
        %340 = vmatpush1.bf16.msra.mxu0 %v317
        %341 = vmatprep.subr.bf16.mxu0 0
        %342 = vmatpush2.bf16.msra.mxu0 0
        %343 = vmatprep.subr.bf16.mxu0 0
        %344 = vmatpush2.bf16.msra.mxu0 0
        %345 = vmatprep.subr.bf16.mxu0 0
        %346 = vmatpush2.bf16.msra.mxu0 0
        %347 = vmatprep.subr.bf16.mxu0 0
        %348 = vmatpush2.bf16.msra.mxu0 0
        %349 = vmatprep.subr.bf16.mxu0 0
        %350 = vmatpush2.bf16.msra.mxu0 0
        %351 = vmatprep.subr.bf16.mxu0 0
        %352 = vmatpush2.bf16.msra.mxu0 0
        %353 = vmatprep.subr.bf16.mxu0 0
        %354 = vmatpush2.bf16.msra.mxu0 0
        %355 = vmatprep.subr.bf16.mxu0 0
        %356 = vmatpush2.bf16.msra.mxu0 0
        %357 = vmatprep.mubr.bf16.mxu0 0
        %358 = vmatmul.mubr.bf16.gmra.mxu0 %v313
        %v359 = vpop.f32.mrf.mxu0
        %v360 = vadd.f32 0.0, %v359
        %v361 = vpop.f32.mrf.mxu0
        %v362 = vadd.f32 0.0, %v361
        %v363 = vpop.f32.mrf.mxu0
        %v364 = vpop.f32.mrf.mxu0
        %365 = vdwg.mxu0
        %366 = vmatprep.subr.bf16.mxu0 0
        %367 = vmatpush1.bf16.msra.mxu0 0
        %368 = vmatprep.subr.bf16.mxu0 0
        %369 = vmatpush1.bf16.msra.mxu0 0
        %370 = vmatprep.subr.bf16.mxu0 0
        %371 = vmatpush1.bf16.msra.mxu0 0
        %372 = vmatprep.subr.bf16.mxu0 0
        %373 = vmatpush1.bf16.msra.mxu0 0
        %374 = vmatprep.subr.bf16.mxu0 0
        %375 = vmatpush1.bf16.msra.mxu0 0
        %376 = vmatprep.subr.bf16.mxu0 0
        %377 = vmatpush1.bf16.msra.mxu0 0
        %378 = vmatprep.subr.bf16.mxu0 0
        %379 = vmatpush1.bf16.msra.mxu0 0
        %380 = vmatprep.subr.bf16.mxu0 0
        %381 = vmatpush1.bf16.msra.mxu0 %v323
        %382 = vmatprep.subr.bf16.mxu0 0
        %383 = vmatpush2.bf16.msra.mxu0 0
        %384 = vmatprep.subr.bf16.mxu0 0
        %385 = vmatpush2.bf16.msra.mxu0 0
        %386 = vmatprep.subr.bf16.mxu0 0
        %387 = vmatpush2.bf16.msra.mxu0 0
        %388 = vmatprep.subr.bf16.mxu0 0
        %389 = vmatpush2.bf16.msra.mxu0 0
        %390 = vmatprep.subr.bf16.mxu0 0
        %391 = vmatpush2.bf16.msra.mxu0 0
        %392 = vmatprep.subr.bf16.mxu0 0
        %393 = vmatpush2.bf16.msra.mxu0 0
        %394 = vmatprep.subr.bf16.mxu0 0
        %395 = vmatpush2.bf16.msra.mxu0 0
        %396 = vmatprep.subr.bf16.mxu0 0
        %397 = vmatpush2.bf16.msra.mxu0 0
        %398 = vmatprep.mubr.bf16.mxu0 0
        %399 = vmatmul.mubr.bf16.gmra.mxu0 %v313
        %v400 = vpop.f32.mrf.mxu0
        %v401 = vadd.f32 0.0, %v400
        %v402 = vpop.f32.mrf.mxu0
        %v403 = vpop.f32.mrf.mxu0
        %v404 = vpop.f32.mrf.mxu0
        %405 = vdwg.mxu0
        %v407 = vsel %vm311, %v296, 0
        %v410 = vsel %vm315, %v293, 0
        %v413 = vsel %vm315, %v294, 0
        %v416 = vsel %vm315, %v295, 0
        %418 = vmatprep.subr.bf16.mxu0 0
        %419 = vmatpush1.bf16.msra.mxu0 0
        %420 = vmatprep.subr.bf16.mxu0 0
        %421 = vmatpush1.bf16.msra.mxu0 0
        %422 = vmatprep.subr.bf16.mxu0 0
        %423 = vmatpush1.bf16.msra.mxu0 0
        %424 = vmatprep.subr.bf16.mxu0 0
        %425 = vmatpush1.bf16.msra.mxu0 0
        %426 = vmatprep.subr.bf16.mxu0 0
        %427 = vmatpush1.bf16.msra.mxu0 0
        %428 = vmatprep.subr.bf16.mxu0 0
        %429 = vmatpush1.bf16.msra.mxu0 0
        %430 = vmatprep.subr.bf16.mxu0 0
        %431 = vmatpush1.bf16.msra.mxu0 0
        %432 = vmatprep.subr.bf16.mxu0 %v413
        %433 = vmatpush1.bf16.msra.mxu0 %v410
        %434 = vmatprep.subr.bf16.mxu0 0
        %435 = vmatpush2.bf16.msra.mxu0 0
        %436 = vmatprep.subr.bf16.mxu0 0
        %437 = vmatpush2.bf16.msra.mxu0 0
        %438 = vmatprep.subr.bf16.mxu0 0
        %439 = vmatpush2.bf16.msra.mxu0 0
        %440 = vmatprep.subr.bf16.mxu0 0
        %441 = vmatpush2.bf16.msra.mxu0 0
        %442 = vmatprep.subr.bf16.mxu0 0
        %443 = vmatpush2.bf16.msra.mxu0 0
        %444 = vmatprep.subr.bf16.mxu0 0
        %445 = vmatpush2.bf16.msra.mxu0 0
        %446 = vmatprep.subr.bf16.mxu0 0
        %447 = vmatpush2.bf16.msra.mxu0 0
        %448 = vmatprep.subr.bf16.mxu0 0
        %449 = vmatpush2.bf16.msra.mxu0 0
        %450 = vmatprep.mubr.bf16.mxu0 0
        %451 = vmatmul.mubr.bf16.gmra.mxu0 %v407
        %v452 = vpop.f32.mrf.mxu0
        %v453 = vadd.f32 %v360, %v452
        %v454 = vpop.f32.mrf.mxu0
        %v455 = vadd.f32 %v362, %v454
        %v456 = vpop.f32.mrf.mxu0
        %v457 = vpop.f32.mrf.mxu0
        %458 = vdwg.mxu0
        %459 = vmatprep.subr.bf16.mxu0 0
        %460 = vmatpush1.bf16.msra.mxu0 0
        %461 = vmatprep.subr.bf16.mxu0 0
        %462 = vmatpush1.bf16.msra.mxu0 0
        %463 = vmatprep.subr.bf16.mxu0 0
        %464 = vmatpush1.bf16.msra.mxu0 0
        %465 = vmatprep.subr.bf16.mxu0 0
        %466 = vmatpush1.bf16.msra.mxu0 0
        %467 = vmatprep.subr.bf16.mxu0 0
        %468 = vmatpush1.bf16.msra.mxu0 0
        %469 = vmatprep.subr.bf16.mxu0 0
        %470 = vmatpush1.bf16.msra.mxu0 0
        %471 = vmatprep.subr.bf16.mxu0 0
        %472 = vmatpush1.bf16.msra.mxu0 0
        %473 = vmatprep.subr.bf16.mxu0 0
        %474 = vmatpush1.bf16.msra.mxu0 %v416
        %475 = vmatprep.subr.bf16.mxu0 0
        %476 = vmatpush2.bf16.msra.mxu0 0
        %477 = vmatprep.subr.bf16.mxu0 0
        %478 = vmatpush2.bf16.msra.mxu0 0
        %479 = vmatprep.subr.bf16.mxu0 0
        %480 = vmatpush2.bf16.msra.mxu0 0
        %481 = vmatprep.subr.bf16.mxu0 0
        %482 = vmatpush2.bf16.msra.mxu0 0
        %483 = vmatprep.subr.bf16.mxu0 0
        %484 = vmatpush2.bf16.msra.mxu0 0
        %485 = vmatprep.subr.bf16.mxu0 0
        %486 = vmatpush2.bf16.msra.mxu0 0
        %487 = vmatprep.subr.bf16.mxu0 0
        %488 = vmatpush2.bf16.msra.mxu0 0
        %489 = vmatprep.subr.bf16.mxu0 0
        %490 = vmatpush2.bf16.msra.mxu0 0
        %491 = vmatprep.mubr.bf16.mxu0 0
        %492 = vmatmul.mubr.bf16.gmra.mxu0 %v407
        %v493 = vpop.f32.mrf.mxu0
        %v494 = vadd.f32 %v401, %v493
        %v495 = vpop.f32.mrf.mxu0
        %v496 = vpop.f32.mrf.mxu0
        %v497 = vpop.f32.mrf.mxu0
        %498 = vdwg.mxu0
        %v499 = vld [vmem:[%s282] sm:$0xff]
        %v500 = vld [vmem:[%s282 + $0x8] sm:$0xf]
        %v502 = vcombine.high %v499, %v499
        %v504 = vpack.c.bf16 %v499, %v499
        %v505 = vpack.c.bf16 %v502, %v502
        %v506 = vpack.c.bf16 %v500, %v500
        %s507 = scalar_lea.vmem %s1, 8
        %v508 = vld [vmem:[%s507] sm:$0xf]
        %512 = vrot.lane.b32.xlu0 %v504, 126
        %v513 = vpop.permute.xlu0 %512
        %514 = vrot.lane.b32.xlu0 %v505, 126
        %v515 = vpop.permute.xlu0 %514
        %516 = vrot.lane.b32.xlu0 %v506, 126
        %v517 = vpop.permute.xlu0 %516
        %vm518 = vcmask 1031168
        %v519 = vsel %vm518, %v513, %v515
        %v520 = vsel %vm518, %v515, %v517
        %v522 = vsel %vm311, %v508, 0
        %v525 = vsel %vm315, %v519, 0
        %v528 = vsel %vm315, %v520, 0
        %v531 = vsel %vm315, %v517, 0
        %533 = vmatprep.subr.bf16.mxu0 0
        %534 = vmatpush1.bf16.msra.mxu0 0
        %535 = vmatprep.subr.bf16.mxu0 0
        %536 = vmatpush1.bf16.msra.mxu0 0
        %537 = vmatprep.subr.bf16.mxu0 0
        %538 = vmatpush1.bf16.msra.mxu0 0
        %539 = vmatprep.subr.bf16.mxu0 0
        %540 = vmatpush1.bf16.msra.mxu0 0
        %541 = vmatprep.subr.bf16.mxu0 0
        %542 = vmatpush1.bf16.msra.mxu0 0
        %543 = vmatprep.subr.bf16.mxu0 0
        %544 = vmatpush1.bf16.msra.mxu0 0
        %545 = vmatprep.subr.bf16.mxu0 0
        %546 = vmatpush1.bf16.msra.mxu0 0
        %547 = vmatprep.subr.bf16.mxu0 %v528
        %548 = vmatpush1.bf16.msra.mxu0 %v525
        %549 = vmatprep.subr.bf16.mxu0 0
        %550 = vmatpush2.bf16.msra.mxu0 0
        %551 = vmatprep.subr.bf16.mxu0 0
        %552 = vmatpush2.bf16.msra.mxu0 0
        %553 = vmatprep.subr.bf16.mxu0 0
        %554 = vmatpush2.bf16.msra.mxu0 0
        %555 = vmatprep.subr.bf16.mxu0 0
        %556 = vmatpush2.bf16.msra.mxu0 0
        %557 = vmatprep.subr.bf16.mxu0 0
        %558 = vmatpush2.bf16.msra.mxu0 0
        %559 = vmatprep.subr.bf16.mxu0 0
        %560 = vmatpush2.bf16.msra.mxu0 0
        %561 = vmatprep.subr.bf16.mxu0 0
        %562 = vmatpush2.bf16.msra.mxu0 0
        %563 = vmatprep.subr.bf16.mxu0 0
        %564 = vmatpush2.bf16.msra.mxu0 0
        %565 = vmatprep.mubr.bf16.mxu0 0
        %566 = vmatmul.mubr.bf16.gmra.mxu0 %v522
        %v567 = vpop.f32.mrf.mxu0
        %v568 = vadd.f32 0.0, %v567
        %v569 = vpop.f32.mrf.mxu0
        %v570 = vadd.f32 0.0, %v569
        %v571 = vpop.f32.mrf.mxu0
        %v572 = vpop.f32.mrf.mxu0
        %573 = vdwg.mxu0
        %574 = vmatprep.subr.bf16.mxu0 0
        %575 = vmatpush1.bf16.msra.mxu0 0
        %576 = vmatprep.subr.bf16.mxu0 0
        %577 = vmatpush1.bf16.msra.mxu0 0
        %578 = vmatprep.subr.bf16.mxu0 0
        %579 = vmatpush1.bf16.msra.mxu0 0
        %580 = vmatprep.subr.bf16.mxu0 0
        %581 = vmatpush1.bf16.msra.mxu0 0
        %582 = vmatprep.subr.bf16.mxu0 0
        %583 = vmatpush1.bf16.msra.mxu0 0
        %584 = vmatprep.subr.bf16.mxu0 0
        %585 = vmatpush1.bf16.msra.mxu0 0
        %586 = vmatprep.subr.bf16.mxu0 0
        %587 = vmatpush1.bf16.msra.mxu0 0
        %588 = vmatprep.subr.bf16.mxu0 0
        %589 = vmatpush1.bf16.msra.mxu0 %v531
        %590 = vmatprep.subr.bf16.mxu0 0
        %591 = vmatpush2.bf16.msra.mxu0 0
        %592 = vmatprep.subr.bf16.mxu0 0
        %593 = vmatpush2.bf16.msra.mxu0 0
        %594 = vmatprep.subr.bf16.mxu0 0
        %595 = vmatpush2.bf16.msra.mxu0 0
        %596 = vmatprep.subr.bf16.mxu0 0
        %597 = vmatpush2.bf16.msra.mxu0 0
        %598 = vmatprep.subr.bf16.mxu0 0
        %599 = vmatpush2.bf16.msra.mxu0 0
        %600 = vmatprep.subr.bf16.mxu0 0
        %601 = vmatpush2.bf16.msra.mxu0 0
        %602 = vmatprep.subr.bf16.mxu0 0
        %603 = vmatpush2.bf16.msra.mxu0 0
        %604 = vmatprep.subr.bf16.mxu0 0
        %605 = vmatpush2.bf16.msra.mxu0 0
        %606 = vmatprep.mubr.bf16.mxu0 0
        %607 = vmatmul.mubr.bf16.gmra.mxu0 %v522
        %v608 = vpop.f32.mrf.mxu0
        %v609 = vadd.f32 0.0, %v608
        %v610 = vpop.f32.mrf.mxu0
        %v611 = vpop.f32.mrf.mxu0
        %v612 = vpop.f32.mrf.mxu0
        %613 = vdwg.mxu0
        %v614 = vadd.f32 %v453, %v568
        %v615 = vadd.f32 %v455, %v570
        %v616 = vadd.f32 %v494, %v609
        %v617 = vld [vmem:[%s282] sm:$0xff]
        %v618 = vld [vmem:[%s282 + $0x8] sm:$0xf]
        %v620 = vcombine.high %v617, %v617
        %v622 = vpack.c.bf16 %v617, %v617
        %v623 = vpack.c.bf16 %v620, %v620
        %v624 = vpack.c.bf16 %v618, %v618
        %s625 = scalar_lea.vmem %s1, 12
        %v626 = vld [vmem:[%s625] sm:$0xf]
        %630 = vrot.lane.b32.xlu0 %v622, 110
        %v631 = vpop.permute.xlu0 %630
        %632 = vrot.lane.b32.xlu0 %v623, 110
        %v633 = vpop.permute.xlu0 %632
        %634 = vrot.lane.b32.xlu0 %v624, 110
        %v635 = vpop.permute.xlu0 %634
        %vm636 = vcmask 900096
        %v637 = vsel %vm636, %v631, %v633
        %v638 = vsel %vm636, %v633, %v635
        %v640 = vsel %vm311, %v626, 0
        %v643 = vsel %vm315, %v637, 0
        %v646 = vsel %vm315, %v638, 0
        %v649 = vsel %vm315, %v635, 0
        %651 = vmatprep.subr.bf16.mxu0 0
        %652 = vmatpush1.bf16.msra.mxu0 0
        %653 = vmatprep.subr.bf16.mxu0 0
        %654 = vmatpush1.bf16.msra.mxu0 0
        %655 = vmatprep.subr.bf16.mxu0 0
        %656 = vmatpush1.bf16.msra.mxu0 0
        %657 = vmatprep.subr.bf16.mxu0 0
        %658 = vmatpush1.bf16.msra.mxu0 0
        %659 = vmatprep.subr.bf16.mxu0 0
        %660 = vmatpush1.bf16.msra.mxu0 0
        %661 = vmatprep.subr.bf16.mxu0 0
        %662 = vmatpush1.bf16.msra.mxu0 0
        %663 = vmatprep.subr.bf16.mxu0 0
        %664 = vmatpush1.bf16.msra.mxu0 0
        %665 = vmatprep.subr.bf16.mxu0 %v646
        %666 = vmatpush1.bf16.msra.mxu0 %v643
        %667 = vmatprep.subr.bf16.mxu0 0
        %668 = vmatpush2.bf16.msra.mxu0 0
        %669 = vmatprep.subr.bf16.mxu0 0
        %670 = vmatpush2.bf16.msra.mxu0 0
        %671 = vmatprep.subr.bf16.mxu0 0
        %672 = vmatpush2.bf16.msra.mxu0 0
        %673 = vmatprep.subr.bf16.mxu0 0
        %674 = vmatpush2.bf16.msra.mxu0 0
        %675 = vmatprep.subr.bf16.mxu0 0
        %676 = vmatpush2.bf16.msra.mxu0 0
        %677 = vmatprep.subr.bf16.mxu0 0
        %678 = vmatpush2.bf16.msra.mxu0 0
        %679 = vmatprep.subr.bf16.mxu0 0
        %680 = vmatpush2.bf16.msra.mxu0 0
        %681 = vmatprep.subr.bf16.mxu0 0
        %682 = vmatpush2.bf16.msra.mxu0 0
        %683 = vmatprep.mubr.bf16.mxu0 0
        %684 = vmatmul.mubr.bf16.gmra.mxu0 %v640
        %v685 = vpop.f32.mrf.mxu0
        %v686 = vadd.f32 0.0, %v685
        %v687 = vpop.f32.mrf.mxu0
        %v688 = vadd.f32 0.0, %v687
        %v689 = vpop.f32.mrf.mxu0
        %v690 = vpop.f32.mrf.mxu0
        %691 = vdwg.mxu0
        %692 = vmatprep.subr.bf16.mxu0 0
        %693 = vmatpush1.bf16.msra.mxu0 0
        %694 = vmatprep.subr.bf16.mxu0 0
        %695 = vmatpush1.bf16.msra.mxu0 0
        %696 = vmatprep.subr.bf16.mxu0 0
        %697 = vmatpush1.bf16.msra.mxu0 0
        %698 = vmatprep.subr.bf16.mxu0 0
        %699 = vmatpush1.bf16.msra.mxu0 0
        %700 = vmatprep.subr.bf16.mxu0 0
        %701 = vmatpush1.bf16.msra.mxu0 0
        %702 = vmatprep.subr.bf16.mxu0 0
        %703 = vmatpush1.bf16.msra.mxu0 0
        %704 = vmatprep.subr.bf16.mxu0 0
        %705 = vmatpush1.bf16.msra.mxu0 0
        %706 = vmatprep.subr.bf16.mxu0 0
        %707 = vmatpush1.bf16.msra.mxu0 %v649
        %708 = vmatprep.subr.bf16.mxu0 0
        %709 = vmatpush2.bf16.msra.mxu0 0
        %710 = vmatprep.subr.bf16.mxu0 0
        %711 = vmatpush2.bf16.msra.mxu0 0
        %712 = vmatprep.subr.bf16.mxu0 0
        %713 = vmatpush2.bf16.msra.mxu0 0
        %714 = vmatprep.subr.bf16.mxu0 0
        %715 = vmatpush2.bf16.msra.mxu0 0
        %716 = vmatprep.subr.bf16.mxu0 0
        %717 = vmatpush2.bf16.msra.mxu0 0
        %718 = vmatprep.subr.bf16.mxu0 0
        %719 = vmatpush2.bf16.msra.mxu0 0
        %720 = vmatprep.subr.bf16.mxu0 0
        %721 = vmatpush2.bf16.msra.mxu0 0
        %722 = vmatprep.subr.bf16.mxu0 0
        %723 = vmatpush2.bf16.msra.mxu0 0
        %724 = vmatprep.mubr.bf16.mxu0 0
        %725 = vmatmul.mubr.bf16.gmra.mxu0 %v640
        %v726 = vpop.f32.mrf.mxu0
        %v727 = vadd.f32 0.0, %v726
        %v728 = vpop.f32.mrf.mxu0
        %v729 = vpop.f32.mrf.mxu0
        %v730 = vpop.f32.mrf.mxu0
        %731 = vdwg.mxu0
        %v732 = vadd.f32 %v614, %v686
        %v733 = vadd.f32 %v615, %v688
        %v734 = vadd.f32 %v616, %v727
        %v735 = vld [vmem:[%s282] sm:$0xff]
        %v736 = vld [vmem:[%s282 + $0x8] sm:$0xf]
        %v738 = vcombine.high %v735, %v735
        %v740 = vpack.c.bf16 %v735, %v735
        %v741 = vpack.c.bf16 %v738, %v738
        %v742 = vpack.c.bf16 %v736, %v736
        %s743 = scalar_lea.vmem %s1, 16
        %v744 = vld [vmem:[%s743] sm:$0xf]
        %748 = vrot.lane.b32.xlu0 %v740, 109
        %v749 = vpop.permute.xlu0 %748
        %750 = vrot.lane.b32.xlu0 %v741, 109
        %v751 = vpop.permute.xlu0 %750
        %752 = vrot.lane.b32.xlu0 %v742, 109
        %v753 = vpop.permute.xlu0 %752
        %vm754 = vcmask 891904
        %v755 = vsel %vm754, %v749, %v751
        %v756 = vsel %vm754, %v751, %v753
        %v758 = vsel %vm311, %v744, 0
        %v761 = vsel %vm315, %v755, 0
        %v764 = vsel %vm315, %v756, 0
        %v767 = vsel %vm315, %v753, 0
        %769 = vmatprep.subr.bf16.mxu0 0
        %770 = vmatpush1.bf16.msra.mxu0 0
        %771 = vmatprep.subr.bf16.mxu0 0
        %772 = vmatpush1.bf16.msra.mxu0 0
        %773 = vmatprep.subr.bf16.mxu0 0
        %774 = vmatpush1.bf16.msra.mxu0 0
        %775 = vmatprep.subr.bf16.mxu0 0
        %776 = vmatpush1.bf16.msra.mxu0 0
        %777 = vmatprep.subr.bf16.mxu0 0
        %778 = vmatpush1.bf16.msra.mxu0 0
        %779 = vmatprep.subr.bf16.mxu0 0
        %780 = vmatpush1.bf16.msra.mxu0 0
        %781 = vmatprep.subr.bf16.mxu0 0
        %782 = vmatpush1.bf16.msra.mxu0 0
        %783 = vmatprep.subr.bf16.mxu0 %v764
        %784 = vmatpush1.bf16.msra.mxu0 %v761
        %785 = vmatprep.subr.bf16.mxu0 0
        %786 = vmatpush2.bf16.msra.mxu0 0
        %787 = vmatprep.subr.bf16.mxu0 0
        %788 = vmatpush2.bf16.msra.mxu0 0
        %789 = vmatprep.subr.bf16.mxu0 0
        %790 = vmatpush2.bf16.msra.mxu0 0
        %791 = vmatprep.subr.bf16.mxu0 0
        %792 = vmatpush2.bf16.msra.mxu0 0
        %793 = vmatprep.subr.bf16.mxu0 0
        %794 = vmatpush2.bf16.msra.mxu0 0
        %795 = vmatprep.subr.bf16.mxu0 0
        %796 = vmatpush2.bf16.msra.mxu0 0
        %797 = vmatprep.subr.bf16.mxu0 0
        %798 = vmatpush2.bf16.msra.mxu0 0
        %799 = vmatprep.subr.bf16.mxu0 0
        %800 = vmatpush2.bf16.msra.mxu0 0
        %801 = vmatprep.mubr.bf16.mxu0 0
        %802 = vmatmul.mubr.bf16.gmra.mxu0 %v758
        %v803 = vpop.f32.mrf.mxu0
        %v804 = vadd.f32 0.0, %v803
        %v805 = vpop.f32.mrf.mxu0
        %v806 = vadd.f32 0.0, %v805
        %v807 = vpop.f32.mrf.mxu0
        %v808 = vpop.f32.mrf.mxu0
        %809 = vdwg.mxu0
        %810 = vmatprep.subr.bf16.mxu0 0
        %811 = vmatpush1.bf16.msra.mxu0 0
        %812 = vmatprep.subr.bf16.mxu0 0
        %813 = vmatpush1.bf16.msra.mxu0 0
        %814 = vmatprep.subr.bf16.mxu0 0
        %815 = vmatpush1.bf16.msra.mxu0 0
        %816 = vmatprep.subr.bf16.mxu0 0
        %817 = vmatpush1.bf16.msra.mxu0 0
        %818 = vmatprep.subr.bf16.mxu0 0
        %819 = vmatpush1.bf16.msra.mxu0 0
        %820 = vmatprep.subr.bf16.mxu0 0
        %821 = vmatpush1.bf16.msra.mxu0 0
        %822 = vmatprep.subr.bf16.mxu0 0
        %823 = vmatpush1.bf16.msra.mxu0 0
        %824 = vmatprep.subr.bf16.mxu0 0
        %825 = vmatpush1.bf16.msra.mxu0 %v767
        %826 = vmatprep.subr.bf16.mxu0 0
        %827 = vmatpush2.bf16.msra.mxu0 0
        %828 = vmatprep.subr.bf16.mxu0 0
        %829 = vmatpush2.bf16.msra.mxu0 0
        %830 = vmatprep.subr.bf16.mxu0 0
        %831 = vmatpush2.bf16.msra.mxu0 0
        %832 = vmatprep.subr.bf16.mxu0 0
        %833 = vmatpush2.bf16.msra.mxu0 0
        %834 = vmatprep.subr.bf16.mxu0 0
        %835 = vmatpush2.bf16.msra.mxu0 0
        %836 = vmatprep.subr.bf16.mxu0 0
        %837 = vmatpush2.bf16.msra.mxu0 0
        %838 = vmatprep.subr.bf16.mxu0 0
        %839 = vmatpush2.bf16.msra.mxu0 0
        %840 = vmatprep.subr.bf16.mxu0 0
        %841 = vmatpush2.bf16.msra.mxu0 0
        %842 = vmatprep.mubr.bf16.mxu0 0
        %843 = vmatmul.mubr.bf16.gmra.mxu0 %v758
        %v844 = vpop.f32.mrf.mxu0
        %v845 = vadd.f32 0.0, %v844
        %v846 = vpop.f32.mrf.mxu0
        %v847 = vpop.f32.mrf.mxu0
        %v848 = vpop.f32.mrf.mxu0
        %849 = vdwg.mxu0
        %v850 = vadd.f32 %v732, %v804
        %v851 = vadd.f32 %v733, %v806
        %v852 = vadd.f32 %v734, %v845
        %v853 = vld [vmem:[%s282] sm:$0xff]
        %v854 = vld [vmem:[%s282 + $0x8] sm:$0xf]
        %v856 = vcombine.high %v853, %v853
        %v858 = vpack.c.bf16 %v853, %v853
        %v859 = vpack.c.bf16 %v856, %v856
        %v860 = vpack.c.bf16 %v854, %v854
        %s861 = scalar_lea.vmem %s1, 20
        %v862 = vld [vmem:[%s861] sm:$0xf]
        %866 = vrot.lane.b32.xlu0 %v858, 108
        %v867 = vpop.permute.xlu0 %866
        %868 = vrot.lane.b32.xlu0 %v859, 108
        %v869 = vpop.permute.xlu0 %868
        %870 = vrot.lane.b32.xlu0 %v860, 108
        %v871 = vpop.permute.xlu0 %870
        %vm872 = vcmask 883712
        %v873 = vsel %vm872, %v867, %v869
        %v874 = vsel %vm872, %v869, %v871
        %v876 = vsel %vm311, %v862, 0
        %v879 = vsel %vm315, %v873, 0
        %v882 = vsel %vm315, %v874, 0
        %v885 = vsel %vm315, %v871, 0
        %887 = vmatprep.subr.bf16.mxu0 0
        %888 = vmatpush1.bf16.msra.mxu0 0
        %889 = vmatprep.subr.bf16.mxu0 0
        %890 = vmatpush1.bf16.msra.mxu0 0
        %891 = vmatprep.subr.bf16.mxu0 0
        %892 = vmatpush1.bf16.msra.mxu0 0
        %893 = vmatprep.subr.bf16.mxu0 0
        %894 = vmatpush1.bf16.msra.mxu0 0
        %895 = vmatprep.subr.bf16.mxu0 0
        %896 = vmatpush1.bf16.msra.mxu0 0
        %897 = vmatprep.subr.bf16.mxu0 0
        %898 = vmatpush1.bf16.msra.mxu0 0
        %899 = vmatprep.subr.bf16.mxu0 0
        %900 = vmatpush1.bf16.msra.mxu0 0
        %901 = vmatprep.subr.bf16.mxu0 %v882
        %902 = vmatpush1.bf16.msra.mxu0 %v879
        %903 = vmatprep.subr.bf16.mxu0 0
        %904 = vmatpush2.bf16.msra.mxu0 0
        %905 = vmatprep.subr.bf16.mxu0 0
        %906 = vmatpush2.bf16.msra.mxu0 0
        %907 = vmatprep.subr.bf16.mxu0 0
        %908 = vmatpush2.bf16.msra.mxu0 0
        %909 = vmatprep.subr.bf16.mxu0 0
        %910 = vmatpush2.bf16.msra.mxu0 0
        %911 = vmatprep.subr.bf16.mxu0 0
        %912 = vmatpush2.bf16.msra.mxu0 0
        %913 = vmatprep.subr.bf16.mxu0 0
        %914 = vmatpush2.bf16.msra.mxu0 0
        %915 = vmatprep.subr.bf16.mxu0 0
        %916 = vmatpush2.bf16.msra.mxu0 0
        %917 = vmatprep.subr.bf16.mxu0 0
        %918 = vmatpush2.bf16.msra.mxu0 0
        %919 = vmatprep.mubr.bf16.mxu0 0
        %920 = vmatmul.mubr.bf16.gmra.mxu0 %v876
        %v921 = vpop.f32.mrf.mxu0
        %v922 = vadd.f32 0.0, %v921
        %v923 = vpop.f32.mrf.mxu0
        %v924 = vadd.f32 0.0, %v923
        %v925 = vpop.f32.mrf.mxu0
        %v926 = vpop.f32.mrf.mxu0
        %927 = vdwg.mxu0
        %928 = vmatprep.subr.bf16.mxu0 0
        %929 = vmatpush1.bf16.msra.mxu0 0
        %930 = vmatprep.subr.bf16.mxu0 0
        %931 = vmatpush1.bf16.msra.mxu0 0
        %932 = vmatprep.subr.bf16.mxu0 0
        %933 = vmatpush1.bf16.msra.mxu0 0
        %934 = vmatprep.subr.bf16.mxu0 0
        %935 = vmatpush1.bf16.msra.mxu0 0
        %936 = vmatprep.subr.bf16.mxu0 0
        %937 = vmatpush1.bf16.msra.mxu0 0
        %938 = vmatprep.subr.bf16.mxu0 0
        %939 = vmatpush1.bf16.msra.mxu0 0
        %940 = vmatprep.subr.bf16.mxu0 0
        %941 = vmatpush1.bf16.msra.mxu0 0
        %942 = vmatprep.subr.bf16.mxu0 0
        %943 = vmatpush1.bf16.msra.mxu0 %v885
        %944 = vmatprep.subr.bf16.mxu0 0
        %945 = vmatpush2.bf16.msra.mxu0 0
        %946 = vmatprep.subr.bf16.mxu0 0
        %947 = vmatpush2.bf16.msra.mxu0 0
        %948 = vmatprep.subr.bf16.mxu0 0
        %949 = vmatpush2.bf16.msra.mxu0 0
        %950 = vmatprep.subr.bf16.mxu0 0
        %951 = vmatpush2.bf16.msra.mxu0 0
        %952 = vmatprep.subr.bf16.mxu0 0
        %953 = vmatpush2.bf16.msra.mxu0 0
        %954 = vmatprep.subr.bf16.mxu0 0
        %955 = vmatpush2.bf16.msra.mxu0 0
        %956 = vmatprep.subr.bf16.mxu0 0
        %957 = vmatpush2.bf16.msra.mxu0 0
        %958 = vmatprep.subr.bf16.mxu0 0
        %959 = vmatpush2.bf16.msra.mxu0 0
        %960 = vmatprep.mubr.bf16.mxu0 0
        %961 = vmatmul.mubr.bf16.gmra.mxu0 %v876
        %v962 = vpop.f32.mrf.mxu0
        %v963 = vadd.f32 0.0, %v962
        %v964 = vpop.f32.mrf.mxu0
        %v965 = vpop.f32.mrf.mxu0
        %v966 = vpop.f32.mrf.mxu0
        %967 = vdwg.mxu0
        %v968 = vadd.f32 %v850, %v922
        %v969 = vadd.f32 %v851, %v924
        %v970 = vadd.f32 %v852, %v963
        %v971 = vld [vmem:[%s282] sm:$0xff]
        %v972 = vld [vmem:[%s282 + $0x8] sm:$0xf]
        %v974 = vcombine.high %v971, %v971
        %v976 = vpack.c.bf16 %v971, %v971
        %v977 = vpack.c.bf16 %v974, %v974
        %v978 = vpack.c.bf16 %v972, %v972
        %s979 = scalar_lea.vmem %s1, 24
        %v980 = vld [vmem:[%s979] sm:$0xf]
        %984 = vrot.lane.b32.xlu0 %v976, 92
        %v985 = vpop.permute.xlu0 %984
        %986 = vrot.lane.b32.xlu0 %v977, 92
        %v987 = vpop.permute.xlu0 %986
        %988 = vrot.lane.b32.xlu0 %v978, 92
        %v989 = vpop.permute.xlu0 %988
        %vm990 = vcmask 752640
        %v991 = vsel %vm990, %v985, %v987
        %v992 = vsel %vm990, %v987, %v989
        %v994 = vsel %vm311, %v980, 0
        %v997 = vsel %vm315, %v991, 0
        %v1000 = vsel %vm315, %v992, 0
        %v1003 = vsel %vm315, %v989, 0
        %1005 = vmatprep.subr.bf16.mxu0 0
        %1006 = vmatpush1.bf16.msra.mxu0 0
        %1007 = vmatprep.subr.bf16.mxu0 0
        %1008 = vmatpush1.bf16.msra.mxu0 0
        %1009 = vmatprep.subr.bf16.mxu0 0
        %1010 = vmatpush1.bf16.msra.mxu0 0
        %1011 = vmatprep.subr.bf16.mxu0 0
        %1012 = vmatpush1.bf16.msra.mxu0 0
        %1013 = vmatprep.subr.bf16.mxu0 0
        %1014 = vmatpush1.bf16.msra.mxu0 0
        %1015 = vmatprep.subr.bf16.mxu0 0
        %1016 = vmatpush1.bf16.msra.mxu0 0
        %1017 = vmatprep.subr.bf16.mxu0 0
        %1018 = vmatpush1.bf16.msra.mxu0 0
        %1019 = vmatprep.subr.bf16.mxu0 %v1000
        %1020 = vmatpush1.bf16.msra.mxu0 %v997
        %1021 = vmatprep.subr.bf16.mxu0 0
        %1022 = vmatpush2.bf16.msra.mxu0 0
        %1023 = vmatprep.subr.bf16.mxu0 0
        %1024 = vmatpush2.bf16.msra.mxu0 0
        %1025 = vmatprep.subr.bf16.mxu0 0
        %1026 = vmatpush2.bf16.msra.mxu0 0
        %1027 = vmatprep.subr.bf16.mxu0 0
        %1028 = vmatpush2.bf16.msra.mxu0 0
        %1029 = vmatprep.subr.bf16.mxu0 0
        %1030 = vmatpush2.bf16.msra.mxu0 0
        %1031 = vmatprep.subr.bf16.mxu0 0
        %1032 = vmatpush2.bf16.msra.mxu0 0
        %1033 = vmatprep.subr.bf16.mxu0 0
        %1034 = vmatpush2.bf16.msra.mxu0 0
        %1035 = vmatprep.subr.bf16.mxu0 0
        %1036 = vmatpush2.bf16.msra.mxu0 0
        %1037 = vmatprep.mubr.bf16.mxu0 0
        %1038 = vmatmul.mubr.bf16.gmra.mxu0 %v994
        %v1039 = vpop.f32.mrf.mxu0
        %v1040 = vadd.f32 0.0, %v1039
        %v1041 = vpop.f32.mrf.mxu0
        %v1042 = vadd.f32 0.0, %v1041
        %v1043 = vpop.f32.mrf.mxu0
        %v1044 = vpop.f32.mrf.mxu0
        %1045 = vdwg.mxu0
        %1046 = vmatprep.subr.bf16.mxu0 0
        %1047 = vmatpush1.bf16.msra.mxu0 0
        %1048 = vmatprep.subr.bf16.mxu0 0
        %1049 = vmatpush1.bf16.msra.mxu0 0
        %1050 = vmatprep.subr.bf16.mxu0 0
        %1051 = vmatpush1.bf16.msra.mxu0 0
        %1052 = vmatprep.subr.bf16.mxu0 0
        %1053 = vmatpush1.bf16.msra.mxu0 0
        %1054 = vmatprep.subr.bf16.mxu0 0
        %1055 = vmatpush1.bf16.msra.mxu0 0
        %1056 = vmatprep.subr.bf16.mxu0 0
        %1057 = vmatpush1.bf16.msra.mxu0 0
        %1058 = vmatprep.subr.bf16.mxu0 0
        %1059 = vmatpush1.bf16.msra.mxu0 0
        %1060 = vmatprep.subr.bf16.mxu0 0
        %1061 = vmatpush1.bf16.msra.mxu0 %v1003
        %1062 = vmatprep.subr.bf16.mxu0 0
        %1063 = vmatpush2.bf16.msra.mxu0 0
        %1064 = vmatprep.subr.bf16.mxu0 0
        %1065 = vmatpush2.bf16.msra.mxu0 0
        %1066 = vmatprep.subr.bf16.mxu0 0
        %1067 = vmatpush2.bf16.msra.mxu0 0
        %1068 = vmatprep.subr.bf16.mxu0 0
        %1069 = vmatpush2.bf16.msra.mxu0 0
        %1070 = vmatprep.subr.bf16.mxu0 0
        %1071 = vmatpush2.bf16.msra.mxu0 0
        %1072 = vmatprep.subr.bf16.mxu0 0
        %1073 = vmatpush2.bf16.msra.mxu0 0
        %1074 = vmatprep.subr.bf16.mxu0 0
        %1075 = vmatpush2.bf16.msra.mxu0 0
        %1076 = vmatprep.subr.bf16.mxu0 0
        %1077 = vmatpush2.bf16.msra.mxu0 0
        %1078 = vmatprep.mubr.bf16.mxu0 0
        %1079 = vmatmul.mubr.bf16.gmra.mxu0 %v994
        %v1080 = vpop.f32.mrf.mxu0
        %v1081 = vadd.f32 0.0, %v1080
        %v1082 = vpop.f32.mrf.mxu0
        %v1083 = vpop.f32.mrf.mxu0
        %v1084 = vpop.f32.mrf.mxu0
        %1085 = vdwg.mxu0
        %v1086 = vadd.f32 %v968, %v1040
        %v1087 = vadd.f32 %v969, %v1042
        %v1088 = vadd.f32 %v970, %v1081
        %v1089 = vld [vmem:[%s282] sm:$0xff]
        %v1090 = vld [vmem:[%s282 + $0x8] sm:$0xf]
        %v1092 = vcombine.high %v1089, %v1089
        %v1094 = vpack.c.bf16 %v1089, %v1089
        %v1095 = vpack.c.bf16 %v1092, %v1092
        %v1096 = vpack.c.bf16 %v1090, %v1090
        %s1097 = scalar_lea.vmem %s1, 28
        %v1098 = vld [vmem:[%s1097] sm:$0xf]
        %1102 = vrot.lane.b32.xlu0 %v1094, 91
        %v1103 = vpop.permute.xlu0 %1102
        %1104 = vrot.lane.b32.xlu0 %v1095, 91
        %v1105 = vpop.permute.xlu0 %1104
        %1106 = vrot.lane.b32.xlu0 %v1096, 91
        %v1107 = vpop.permute.xlu0 %1106
        %vm1108 = vcmask 744448
        %v1109 = vsel %vm1108, %v1103, %v1105
        %v1110 = vsel %vm1108, %v1105, %v1107
        %v1112 = vsel %vm311, %v1098, 0
        %v1115 = vsel %vm315, %v1109, 0
        %v1118 = vsel %vm315, %v1110, 0
        %v1121 = vsel %vm315, %v1107, 0
        %1123 = vmatprep.subr.bf16.mxu0 0
        %1124 = vmatpush1.bf16.msra.mxu0 0
        %1125 = vmatprep.subr.bf16.mxu0 0
        %1126 = vmatpush1.bf16.msra.mxu0 0
        %1127 = vmatprep.subr.bf16.mxu0 0
        %1128 = vmatpush1.bf16.msra.mxu0 0
        %1129 = vmatprep.subr.bf16.mxu0 0
        %1130 = vmatpush1.bf16.msra.mxu0 0
        %1131 = vmatprep.subr.bf16.mxu0 0
        %1132 = vmatpush1.bf16.msra.mxu0 0
        %1133 = vmatprep.subr.bf16.mxu0 0
        %1134 = vmatpush1.bf16.msra.mxu0 0
        %1135 = vmatprep.subr.bf16.mxu0 0
        %1136 = vmatpush1.bf16.msra.mxu0 0
        %1137 = vmatprep.subr.bf16.mxu0 %v1118
        %1138 = vmatpush1.bf16.msra.mxu0 %v1115
        %1139 = vmatprep.subr.bf16.mxu0 0
        %1140 = vmatpush2.bf16.msra.mxu0 0
        %1141 = vmatprep.subr.bf16.mxu0 0
        %1142 = vmatpush2.bf16.msra.mxu0 0
        %1143 = vmatprep.subr.bf16.mxu0 0
        %1144 = vmatpush2.bf16.msra.mxu0 0
        %1145 = vmatprep.subr.bf16.mxu0 0
        %1146 = vmatpush2.bf16.msra.mxu0 0
        %1147 = vmatprep.subr.bf16.mxu0 0
        %1148 = vmatpush2.bf16.msra.mxu0 0
        %1149 = vmatprep.subr.bf16.mxu0 0
        %1150 = vmatpush2.bf16.msra.mxu0 0
        %1151 = vmatprep.subr.bf16.mxu0 0
        %1152 = vmatpush2.bf16.msra.mxu0 0
        %1153 = vmatprep.subr.bf16.mxu0 0
        %1154 = vmatpush2.bf16.msra.mxu0 0
        %1155 = vmatprep.mubr.bf16.mxu0 0
        %1156 = vmatmul.mubr.bf16.gmra.mxu0 %v1112
        %v1157 = vpop.f32.mrf.mxu0
        %v1158 = vadd.f32 0.0, %v1157
        %v1159 = vpop.f32.mrf.mxu0
        %v1160 = vadd.f32 0.0, %v1159
        %v1161 = vpop.f32.mrf.mxu0
        %v1162 = vpop.f32.mrf.mxu0
        %1163 = vdwg.mxu0
        %1164 = vmatprep.subr.bf16.mxu0 0
        %1165 = vmatpush1.bf16.msra.mxu0 0
        %1166 = vmatprep.subr.bf16.mxu0 0
        %1167 = vmatpush1.bf16.msra.mxu0 0
        %1168 = vmatprep.subr.bf16.mxu0 0
        %1169 = vmatpush1.bf16.msra.mxu0 0
        %1170 = vmatprep.subr.bf16.mxu0 0
        %1171 = vmatpush1.bf16.msra.mxu0 0
        %1172 = vmatprep.subr.bf16.mxu0 0
        %1173 = vmatpush1.bf16.msra.mxu0 0
        %1174 = vmatprep.subr.bf16.mxu0 0
        %1175 = vmatpush1.bf16.msra.mxu0 0
        %1176 = vmatprep.subr.bf16.mxu0 0
        %1177 = vmatpush1.bf16.msra.mxu0 0
        %1178 = vmatprep.subr.bf16.mxu0 0
        %1179 = vmatpush1.bf16.msra.mxu0 %v1121
        %1180 = vmatprep.subr.bf16.mxu0 0
        %1181 = vmatpush2.bf16.msra.mxu0 0
        %1182 = vmatprep.subr.bf16.mxu0 0
        %1183 = vmatpush2.bf16.msra.mxu0 0
        %1184 = vmatprep.subr.bf16.mxu0 0
        %1185 = vmatpush2.bf16.msra.mxu0 0
        %1186 = vmatprep.subr.bf16.mxu0 0
        %1187 = vmatpush2.bf16.msra.mxu0 0
        %1188 = vmatprep.subr.bf16.mxu0 0
        %1189 = vmatpush2.bf16.msra.mxu0 0
        %1190 = vmatprep.subr.bf16.mxu0 0
        %1191 = vmatpush2.bf16.msra.mxu0 0
        %1192 = vmatprep.subr.bf16.mxu0 0
        %1193 = vmatpush2.bf16.msra.mxu0 0
        %1194 = vmatprep.subr.bf16.mxu0 0
        %1195 = vmatpush2.bf16.msra.mxu0 0
        %1196 = vmatprep.mubr.bf16.mxu0 0
        %1197 = vmatmul.mubr.bf16.gmra.mxu0 %v1112
        %v1198 = vpop.f32.mrf.mxu0
        %v1199 = vadd.f32 0.0, %v1198
        %v1200 = vpop.f32.mrf.mxu0
        %v1201 = vpop.f32.mrf.mxu0
        %v1202 = vpop.f32.mrf.mxu0
        %1203 = vdwg.mxu0
        %v1204 = vadd.f32 %v1086, %v1158
        %v1205 = vadd.f32 %v1087, %v1160
        %v1206 = vadd.f32 %v1088, %v1199
        %v1207 = vld [vmem:[%s282] sm:$0xff]
        %v1208 = vld [vmem:[%s282 + $0x8] sm:$0xf]
        %v1210 = vcombine.high %v1207, %v1207
        %v1212 = vpack.c.bf16 %v1207, %v1207
        %v1213 = vpack.c.bf16 %v1210, %v1210
        %v1214 = vpack.c.bf16 %v1208, %v1208
        %s1215 = scalar_lea.vmem %s1, 32
        %v1216 = vld [vmem:[%s1215] sm:$0xf]
        %1220 = vrot.lane.b32.xlu0 %v1212, 90
        %v1221 = vpop.permute.xlu0 %1220
        %1222 = vrot.lane.b32.xlu0 %v1213, 90
        %v1223 = vpop.permute.xlu0 %1222
        %1224 = vrot.lane.b32.xlu0 %v1214, 90
        %v1225 = vpop.permute.xlu0 %1224
        %vm1226 = vcmask 736256
        %v1227 = vsel %vm1226, %v1221, %v1223
        %v1228 = vsel %vm1226, %v1223, %v1225
        %v1230 = vsel %vm311, %v1216, 0
        %v1233 = vsel %vm315, %v1227, 0
        %v1236 = vsel %vm315, %v1228, 0
        %v1239 = vsel %vm315, %v1225, 0
        %1241 = vmatprep.subr.bf16.mxu0 0
        %1242 = vmatpush1.bf16.msra.mxu0 0
        %1243 = vmatprep.subr.bf16.mxu0 0
        %1244 = vmatpush1.bf16.msra.mxu0 0
        %1245 = vmatprep.subr.bf16.mxu0 0
        %1246 = vmatpush1.bf16.msra.mxu0 0
        %1247 = vmatprep.subr.bf16.mxu0 0
        %1248 = vmatpush1.bf16.msra.mxu0 0
        %1249 = vmatprep.subr.bf16.mxu0 0
        %1250 = vmatpush1.bf16.msra.mxu0 0
        %1251 = vmatprep.subr.bf16.mxu0 0
        %1252 = vmatpush1.bf16.msra.mxu0 0
        %1253 = vmatprep.subr.bf16.mxu0 0
        %1254 = vmatpush1.bf16.msra.mxu0 0
        %1255 = vmatprep.subr.bf16.mxu0 %v1236
        %1256 = vmatpush1.bf16.msra.mxu0 %v1233
        %1257 = vmatprep.subr.bf16.mxu0 0
        %1258 = vmatpush2.bf16.msra.mxu0 0
        %1259 = vmatprep.subr.bf16.mxu0 0
        %1260 = vmatpush2.bf16.msra.mxu0 0
        %1261 = vmatprep.subr.bf16.mxu0 0
        %1262 = vmatpush2.bf16.msra.mxu0 0
        %1263 = vmatprep.subr.bf16.mxu0 0
        %1264 = vmatpush2.bf16.msra.mxu0 0
        %1265 = vmatprep.subr.bf16.mxu0 0
        %1266 = vmatpush2.bf16.msra.mxu0 0
        %1267 = vmatprep.subr.bf16.mxu0 0
        %1268 = vmatpush2.bf16.msra.mxu0 0
        %1269 = vmatprep.subr.bf16.mxu0 0
        %1270 = vmatpush2.bf16.msra.mxu0 0
        %1271 = vmatprep.subr.bf16.mxu0 0
        %1272 = vmatpush2.bf16.msra.mxu0 0
        %1273 = vmatprep.mubr.bf16.mxu0 0
        %1274 = vmatmul.mubr.bf16.gmra.mxu0 %v1230
        %v1275 = vpop.f32.mrf.mxu0
        %v1276 = vadd.f32 0.0, %v1275
        %v1277 = vpop.f32.mrf.mxu0
        %v1278 = vadd.f32 0.0, %v1277
        %v1279 = vpop.f32.mrf.mxu0
        %v1280 = vpop.f32.mrf.mxu0
        %1281 = vdwg.mxu0
        %1282 = vmatprep.subr.bf16.mxu0 0
        %1283 = vmatpush1.bf16.msra.mxu0 0
        %1284 = vmatprep.subr.bf16.mxu0 0
        %1285 = vmatpush1.bf16.msra.mxu0 0
        %1286 = vmatprep.subr.bf16.mxu0 0
        %1287 = vmatpush1.bf16.msra.mxu0 0
        %1288 = vmatprep.subr.bf16.mxu0 0
        %1289 = vmatpush1.bf16.msra.mxu0 0
        %1290 = vmatprep.subr.bf16.mxu0 0
        %1291 = vmatpush1.bf16.msra.mxu0 0
        %1292 = vmatprep.subr.bf16.mxu0 0
        %1293 = vmatpush1.bf16.msra.mxu0 0
        %1294 = vmatprep.subr.bf16.mxu0 0
        %1295 = vmatpush1.bf16.msra.mxu0 0
        %1296 = vmatprep.subr.bf16.mxu0 0
        %1297 = vmatpush1.bf16.msra.mxu0 %v1239
        %1298 = vmatprep.subr.bf16.mxu0 0
        %1299 = vmatpush2.bf16.msra.mxu0 0
        %1300 = vmatprep.subr.bf16.mxu0 0
        %1301 = vmatpush2.bf16.msra.mxu0 0
        %1302 = vmatprep.subr.bf16.mxu0 0
        %1303 = vmatpush2.bf16.msra.mxu0 0
        %1304 = vmatprep.subr.bf16.mxu0 0
        %1305 = vmatpush2.bf16.msra.mxu0 0
        %1306 = vmatprep.subr.bf16.mxu0 0
        %1307 = vmatpush2.bf16.msra.mxu0 0
        %1308 = vmatprep.subr.bf16.mxu0 0
        %1309 = vmatpush2.bf16.msra.mxu0 0
        %1310 = vmatprep.subr.bf16.mxu0 0
        %1311 = vmatpush2.bf16.msra.mxu0 0
        %1312 = vmatprep.subr.bf16.mxu0 0
        %1313 = vmatpush2.bf16.msra.mxu0 0
        %1314 = vmatprep.mubr.bf16.mxu0 0
        %1315 = vmatmul.mubr.bf16.gmra.mxu0 %v1230
        %v1316 = vpop.f32.mrf.mxu0
        %v1317 = vadd.f32 0.0, %v1316
        %v1318 = vpop.f32.mrf.mxu0
        %v1319 = vpop.f32.mrf.mxu0
        %v1320 = vpop.f32.mrf.mxu0
        %1321 = vdwg.mxu0
        %v1322 = vadd.f32 %v1204, %v1276
        %v1323 = vadd.f32 %v1205, %v1278
        %v1324 = vadd.f32 %v1206, %v1317
        %v1325 = vld [vmem:[%s2] sm:$0xff]
        %1327 = vset.pattern.permute.xlu0 0
        %1328 = vperm.xlu0 %1327, %v1325
        %v1329 = vpop.permute.xlu0 %1328
        %v1331 = vadd.f32 %v1322, %v1329
        %v1332 = vadd.f32 %v1323, %v1329
        %v1333 = vadd.f32 %v1324, %v1329
        %v1334 = vmax.f32 %v1331, 0.0
        %v1335 = vmax.f32 %v1332, 0.0
        %v1336 = vmax.f32 %v1333, 0.0
        %v1337 = vld [vmem:[%s3] sm:$0xff]
        %v1338 = vld [vmem:[%s3 + $0x8] sm:$0xff]
        %v1339 = vld [vmem:[%s3 + $0x10] sm:$0xff]
        %v1340 = vld [vmem:[%s3 + $0x18] sm:$0xff]
        %v1341 = vld [vmem:[%s3 + $0x20] sm:$0xff]
        %v1342 = vld [vmem:[%s3 + $0x28] sm:$0xff]
        %v1343 = vld [vmem:[%s3 + $0x30] sm:$0xff]
        %v1344 = vld [vmem:[%s3 + $0x38] sm:$0xff]
        %v1345 = vld [vmem:[%s3 + $0x40] sm:$0xff]
        %v1346 = vld [vmem:[%s3 + $0x48] sm:$0xff]
        %v1347 = vld [vmem:[%s3 + $0x50] sm:$0xff]
        %v1348 = vld [vmem:[%s3 + $0x58] sm:$0xff]
        %v1349 = vld [vmem:[%s3 + $0x60] sm:$0xff]
        %v1350 = vld [vmem:[%s3 + $0x68] sm:$0xff]
        %v1351 = vld [vmem:[%s3 + $0x70] sm:$0xff]
        %v1352 = vld [vmem:[%s3 + $0x78] sm:$0xff]
        %v1353 = vld [vmem:[%s3 + $0x80] sm:$0xff]
        %v1354 = vld [vmem:[%s3 + $0x88] sm:$0xff]
        %v1355 = vld [vmem:[%s3 + $0x90] sm:$0xff]
        %v1356 = vld [vmem:[%s3 + $0x98] sm:$0xff]
        %v1357 = vld [vmem:[%s3 + $0xa0] sm:$0xff]
        %v1358 = vld [vmem:[%s3 + $0xa8] sm:$0xff]
        %v1359 = vld [vmem:[%s3 + $0xb0] sm:$0xff]
        %v1360 = vld [vmem:[%s3 + $0xb8] sm:$0xff]
        %v1361 = vld [vmem:[%s3 + $0xc0] sm:$0xff]
        %v1362 = vld [vmem:[%s3 + $0xc8] sm:$0xff]
        %v1363 = vld [vmem:[%s3 + $0xd0] sm:$0xff]
        %v1364 = vld [vmem:[%s3 + $0xd8] sm:$0xff]
        %v1365 = vld [vmem:[%s3 + $0xe0] sm:$0xff]
        %v1366 = vld [vmem:[%s3 + $0xe8] sm:$0xff]
        %v1367 = vld [vmem:[%s3 + $0xf0] sm:$0xff]
        %v1368 = vld [vmem:[%s3 + $0xf8] sm:$0xff]
        %v1369 = vld [vmem:[%s3 + $0x100] sm:$0xff]
        %v1370 = vld [vmem:[%s3 + $0x108] sm:$0xff]
        %v1371 = vld [vmem:[%s3 + $0x110] sm:$0xff]
        %v1372 = vld [vmem:[%s3 + $0x118] sm:$0xff]
        %vm1373 = vcmask 261120
        %v1375 = vsel %vm1373, %v1336, 0
        %1377 = vmatprep.subr.mxu0 0.0
        %1378 = vmatpush1.msra.mxu0 %v1352
        %1379 = vmatprep.subr.mxu0 0.0
        %1380 = vmatpush1.msra.mxu0 %v1351
        %1381 = vmatprep.subr.mxu0 0.0
        %1382 = vmatpush1.msra.mxu0 %v1350
        %1383 = vmatprep.subr.mxu0 0.0
        %1384 = vmatpush1.msra.mxu0 %v1349
        %1385 = vmatprep.subr.mxu0 0.0
        %1386 = vmatpush1.msra.mxu0 %v1348
        %1387 = vmatprep.subr.mxu0 0.0
        %1388 = vmatpush1.msra.mxu0 %v1347
        %1389 = vmatprep.subr.mxu0 0.0
        %1390 = vmatpush1.msra.mxu0 %v1346
        %1391 = vmatprep.subr.mxu0 0.0
        %1392 = vmatpush1.msra.mxu0 %v1345
        %1393 = vmatprep.subr.mxu0 0.0
        %1394 = vmatpush1.msra.mxu0 %v1344
        %1395 = vmatprep.subr.mxu0 0.0
        %1396 = vmatpush1.msra.mxu0 %v1343
        %1397 = vmatprep.subr.mxu0 0.0
        %1398 = vmatpush1.msra.mxu0 %v1342
        %1399 = vmatprep.subr.mxu0 0.0
        %1400 = vmatpush1.msra.mxu0 %v1341
        %1401 = vmatprep.subr.mxu0 0.0
        %1402 = vmatpush1.msra.mxu0 %v1340
        %1403 = vmatprep.subr.mxu0 0.0
        %1404 = vmatpush1.msra.mxu0 %v1339
        %1405 = vmatprep.subr.mxu0 0.0
        %1406 = vmatpush1.msra.mxu0 %v1338
        %1407 = vmatprep.subr.mxu0 0.0
        %1408 = vmatpush1.msra.mxu0 %v1337
        %1409 = vmatprep.subr.mxu0 0.0
        %1410 = vmatpush2.msra.mxu0 %v1368
        %1411 = vmatprep.subr.mxu0 0.0
        %1412 = vmatpush2.msra.mxu0 %v1367
        %1413 = vmatprep.subr.mxu0 0.0
        %1414 = vmatpush2.msra.mxu0 %v1366
        %1415 = vmatprep.subr.mxu0 0.0
        %1416 = vmatpush2.msra.mxu0 %v1365
        %1417 = vmatprep.subr.mxu0 0.0
        %1418 = vmatpush2.msra.mxu0 %v1364
        %1419 = vmatprep.subr.mxu0 0.0
        %1420 = vmatpush2.msra.mxu0 %v1363
        %1421 = vmatprep.subr.mxu0 0.0
        %1422 = vmatpush2.msra.mxu0 %v1362
        %1423 = vmatprep.subr.mxu0 0.0
        %1424 = vmatpush2.msra.mxu0 %v1361
        %1425 = vmatprep.subr.mxu0 0.0
        %1426 = vmatpush2.msra.mxu0 %v1360
        %1427 = vmatprep.subr.mxu0 0.0
        %1428 = vmatpush2.msra.mxu0 %v1359
        %1429 = vmatprep.subr.mxu0 0.0
        %1430 = vmatpush2.msra.mxu0 %v1358
        %1431 = vmatprep.subr.mxu0 0.0
        %1432 = vmatpush2.msra.mxu0 %v1357
        %1433 = vmatprep.subr.mxu0 0.0
        %1434 = vmatpush2.msra.mxu0 %v1356
        %1435 = vmatprep.subr.mxu0 0.0
        %1436 = vmatpush2.msra.mxu0 %v1355
        %1437 = vmatprep.subr.mxu0 0.0
        %1438 = vmatpush2.msra.mxu0 %v1354
        %1439 = vmatprep.subr.mxu0 0.0
        %1440 = vmatpush2.msra.mxu0 %v1353
        %1441 = vmatprep.mubr.f32.mxu0 %v1335
        %1442 = vmatmul.mubr.f32.gmra.mxu0 %v1334
        %v1443 = vpop.f32.mrf.mxu0
        %v1444 = vadd.f32 0.0, %v1443
        %v1445 = vpop.f32.mrf.mxu0
        %1446 = vdwg.mxu0
        %1447 = vmatprep.subr.mxu0 0.0
        %1448 = vmatpush1.msra.mxu0 0.0
        %1449 = vmatprep.subr.mxu0 0.0
        %1450 = vmatpush1.msra.mxu0 0.0
        %1451 = vmatprep.subr.mxu0 0.0
        %1452 = vmatpush1.msra.mxu0 0.0
        %1453 = vmatprep.subr.mxu0 0.0
        %1454 = vmatpush1.msra.mxu0 0.0
        %1455 = vmatprep.subr.mxu0 0.0
        %1456 = vmatpush1.msra.mxu0 0.0
        %1457 = vmatprep.subr.mxu0 0.0
        %1458 = vmatpush1.msra.mxu0 0.0
        %1459 = vmatprep.subr.mxu0 0.0
        %1460 = vmatpush1.msra.mxu0 0.0
        %1461 = vmatprep.subr.mxu0 0.0
        %1462 = vmatpush1.msra.mxu0 0.0
        %1463 = vmatprep.subr.mxu0 0.0
        %1464 = vmatpush1.msra.mxu0 0.0
        %1465 = vmatprep.subr.mxu0 0.0
        %1466 = vmatpush1.msra.mxu0 0.0
        %1467 = vmatprep.subr.mxu0 0.0
        %1468 = vmatpush1.msra.mxu0 0.0
        %1469 = vmatprep.subr.mxu0 0.0
        %1470 = vmatpush1.msra.mxu0 0.0
        %1471 = vmatprep.subr.mxu0 0.0
        %1472 = vmatpush1.msra.mxu0 %v1372
        %1473 = vmatprep.subr.mxu0 0.0
        %1474 = vmatpush1.msra.mxu0 %v1371
        %1475 = vmatprep.subr.mxu0 0.0
        %1476 = vmatpush1.msra.mxu0 %v1370
        %1477 = vmatprep.subr.mxu0 0.0
        %1478 = vmatpush1.msra.mxu0 %v1369
        %1479 = vmatprep.subr.mxu0 0.0
        %1480 = vmatpush2.msra.mxu0 0.0
        %1481 = vmatprep.subr.mxu0 0.0
        %1482 = vmatpush2.msra.mxu0 0.0
        %1483 = vmatprep.subr.mxu0 0.0
        %1484 = vmatpush2.msra.mxu0 0.0
        %1485 = vmatprep.subr.mxu0 0.0
        %1486 = vmatpush2.msra.mxu0 0.0
        %1487 = vmatprep.subr.mxu0 0.0
        %1488 = vmatpush2.msra.mxu0 0.0
        %1489 = vmatprep.subr.mxu0 0.0
        %1490 = vmatpush2.msra.mxu0 0.0
        %1491 = vmatprep.subr.mxu0 0.0
        %1492 = vmatpush2.msra.mxu0 0.0
        %1493 = vmatprep.subr.mxu0 0.0
        %1494 = vmatpush2.msra.mxu0 0.0
        %1495 = vmatprep.subr.mxu0 0.0
        %1496 = vmatpush2.msra.mxu0 0.0
        %1497 = vmatprep.subr.mxu0 0.0
        %1498 = vmatpush2.msra.mxu0 0.0
        %1499 = vmatprep.subr.mxu0 0.0
        %1500 = vmatpush2.msra.mxu0 0.0
        %1501 = vmatprep.subr.mxu0 0.0
        %1502 = vmatpush2.msra.mxu0 0.0
        %1503 = vmatprep.subr.mxu0 0.0
        %1504 = vmatpush2.msra.mxu0 0.0
        %1505 = vmatprep.subr.mxu0 0.0
        %1506 = vmatpush2.msra.mxu0 0.0
        %1507 = vmatprep.subr.mxu0 0.0
        %1508 = vmatpush2.msra.mxu0 0.0
        %1509 = vmatprep.subr.mxu0 0.0
        %1510 = vmatpush2.msra.mxu0 0.0
        %1511 = vmatprep.mubr.f32.mxu0 0.0
        %1512 = vmatmul.mubr.f32.gmra.mxu0 %v1375
        %v1513 = vpop.f32.mrf.mxu0
        %v1514 = vadd.f32 %v1444, %v1513
        %v1515 = vpop.f32.mrf.mxu0
        %1516 = vdwg.mxu0
        %s1517 = scalar_lea.vmem %s3, 288
        %v1518 = vld [vmem:[%s1517] sm:$0xff]
        %v1519 = vld [vmem:[%s1517 + $0x8] sm:$0xff]
        %v1520 = vld [vmem:[%s1517 + $0x10] sm:$0xff]
        %v1521 = vld [vmem:[%s1517 + $0x18] sm:$0xff]
        %v1522 = vld [vmem:[%s1517 + $0x20] sm:$0xff]
        %v1523 = vld [vmem:[%s1517 + $0x28] sm:$0xff]
        %v1524 = vld [vmem:[%s1517 + $0x30] sm:$0xff]
        %v1525 = vld [vmem:[%s1517 + $0x38] sm:$0xff]
        %v1526 = vld [vmem:[%s1517 + $0x40] sm:$0xff]
        %v1527 = vld [vmem:[%s1517 + $0x48] sm:$0xff]
        %v1528 = vld [vmem:[%s1517 + $0x50] sm:$0xff]
        %v1529 = vld [vmem:[%s1517 + $0x58] sm:$0xff]
        %v1530 = vld [vmem:[%s1517 + $0x60] sm:$0xff]
        %v1531 = vld [vmem:[%s1517 + $0x68] sm:$0xff]
        %v1532 = vld [vmem:[%s1517 + $0x70] sm:$0xff]
        %v1533 = vld [vmem:[%s1517 + $0x78] sm:$0xff]
        %v1534 = vld [vmem:[%s1517 + $0x80] sm:$0xff]
        %v1535 = vld [vmem:[%s1517 + $0x88] sm:$0xff]
        %v1536 = vld [vmem:[%s1517 + $0x90] sm:$0xff]
        %v1537 = vld [vmem:[%s1517 + $0x98] sm:$0xff]
        %v1538 = vld [vmem:[%s1517 + $0xa0] sm:$0xff]
        %v1539 = vld [vmem:[%s1517 + $0xa8] sm:$0xff]
        %v1540 = vld [vmem:[%s1517 + $0xb0] sm:$0xff]
        %v1541 = vld [vmem:[%s1517 + $0xb8] sm:$0xff]
        %v1542 = vld [vmem:[%s1517 + $0xc0] sm:$0xff]
        %v1543 = vld [vmem:[%s1517 + $0xc8] sm:$0xff]
        %v1544 = vld [vmem:[%s1517 + $0xd0] sm:$0xff]
        %v1545 = vld [vmem:[%s1517 + $0xd8] sm:$0xff]
        %v1546 = vld [vmem:[%s1517 + $0xe0] sm:$0xff]
        %v1547 = vld [vmem:[%s1517 + $0xe8] sm:$0xff]
        %v1548 = vld [vmem:[%s1517 + $0xf0] sm:$0xff]
        %v1549 = vld [vmem:[%s1517 + $0xf8] sm:$0xff]
        %v1550 = vld [vmem:[%s1517 + $0x100] sm:$0xff]
        %v1551 = vld [vmem:[%s1517 + $0x108] sm:$0xff]
        %v1552 = vld [vmem:[%s1517 + $0x110] sm:$0xff]
        %v1553 = vld [vmem:[%s1517 + $0x118] sm:$0xff]
        %1554 = vmatprep.subr.mxu0 0.0
        %1555 = vmatpush1.msra.mxu0 %v1533
        %1556 = vmatprep.subr.mxu0 0.0
        %1557 = vmatpush1.msra.mxu0 %v1532
        %1558 = vmatprep.subr.mxu0 0.0
        %1559 = vmatpush1.msra.mxu0 %v1531
        %1560 = vmatprep.subr.mxu0 0.0
        %1561 = vmatpush1.msra.mxu0 %v1530
        %1562 = vmatprep.subr.mxu0 0.0
        %1563 = vmatpush1.msra.mxu0 %v1529
        %1564 = vmatprep.subr.mxu0 0.0
        %1565 = vmatpush1.msra.mxu0 %v1528
        %1566 = vmatprep.subr.mxu0 0.0
        %1567 = vmatpush1.msra.mxu0 %v1527
        %1568 = vmatprep.subr.mxu0 0.0
        %1569 = vmatpush1.msra.mxu0 %v1526
        %1570 = vmatprep.subr.mxu0 0.0
        %1571 = vmatpush1.msra.mxu0 %v1525
        %1572 = vmatprep.subr.mxu0 0.0
        %1573 = vmatpush1.msra.mxu0 %v1524
        %1574 = vmatprep.subr.mxu0 0.0
        %1575 = vmatpush1.msra.mxu0 %v1523
        %1576 = vmatprep.subr.mxu0 0.0
        %1577 = vmatpush1.msra.mxu0 %v1522
        %1578 = vmatprep.subr.mxu0 0.0
        %1579 = vmatpush1.msra.mxu0 %v1521
        %1580 = vmatprep.subr.mxu0 0.0
        %1581 = vmatpush1.msra.mxu0 %v1520
        %1582 = vmatprep.subr.mxu0 0.0
        %1583 = vmatpush1.msra.mxu0 %v1519
        %1584 = vmatprep.subr.mxu0 0.0
        %1585 = vmatpush1.msra.mxu0 %v1518
        %1586 = vmatprep.subr.mxu0 0.0
        %1587 = vmatpush2.msra.mxu0 %v1549
        %1588 = vmatprep.subr.mxu0 0.0
        %1589 = vmatpush2.msra.mxu0 %v1548
        %1590 = vmatprep.subr.mxu0 0.0
        %1591 = vmatpush2.msra.mxu0 %v1547
        %1592 = vmatprep.subr.mxu0 0.0
        %1593 = vmatpush2.msra.mxu0 %v1546
        %1594 = vmatprep.subr.mxu0 0.0
        %1595 = vmatpush2.msra.mxu0 %v1545
        %1596 = vmatprep.subr.mxu0 0.0
        %1597 = vmatpush2.msra.mxu0 %v1544
        %1598 = vmatprep.subr.mxu0 0.0
        %1599 = vmatpush2.msra.mxu0 %v1543
        %1600 = vmatprep.subr.mxu0 0.0
        %1601 = vmatpush2.msra.mxu0 %v1542
        %1602 = vmatprep.subr.mxu0 0.0
        %1603 = vmatpush2.msra.mxu0 %v1541
        %1604 = vmatprep.subr.mxu0 0.0
        %1605 = vmatpush2.msra.mxu0 %v1540
        %1606 = vmatprep.subr.mxu0 0.0
        %1607 = vmatpush2.msra.mxu0 %v1539
        %1608 = vmatprep.subr.mxu0 0.0
        %1609 = vmatpush2.msra.mxu0 %v1538
        %1610 = vmatprep.subr.mxu0 0.0
        %1611 = vmatpush2.msra.mxu0 %v1537
        %1612 = vmatprep.subr.mxu0 0.0
        %1613 = vmatpush2.msra.mxu0 %v1536
        %1614 = vmatprep.subr.mxu0 0.0
        %1615 = vmatpush2.msra.mxu0 %v1535
        %1616 = vmatprep.subr.mxu0 0.0
        %1617 = vmatpush2.msra.mxu0 %v1534
        %1618 = vmatprep.mubr.f32.mxu0 %v1335
        %1619 = vmatmul.mubr.f32.gmra.mxu0 %v1334
        %v1620 = vpop.f32.mrf.mxu0
        %v1621 = vadd.f32 0.0, %v1620
        %v1622 = vpop.f32.mrf.mxu0
        %1623 = vdwg.mxu0
        %1624 = vmatprep.subr.mxu0 0.0
        %1625 = vmatpush1.msra.mxu0 0.0
        %1626 = vmatprep.subr.mxu0 0.0
        %1627 = vmatpush1.msra.mxu0 0.0
        %1628 = vmatprep.subr.mxu0 0.0
        %1629 = vmatpush1.msra.mxu0 0.0
        %1630 = vmatprep.subr.mxu0 0.0
        %1631 = vmatpush1.msra.mxu0 0.0
        %1632 = vmatprep.subr.mxu0 0.0
        %1633 = vmatpush1.msra.mxu0 0.0
        %1634 = vmatprep.subr.mxu0 0.0
        %1635 = vmatpush1.msra.mxu0 0.0
        %1636 = vmatprep.subr.mxu0 0.0
        %1637 = vmatpush1.msra.mxu0 0.0
        %1638 = vmatprep.subr.mxu0 0.0
        %1639 = vmatpush1.msra.mxu0 0.0
        %1640 = vmatprep.subr.mxu0 0.0
        %1641 = vmatpush1.msra.mxu0 0.0
        %1642 = vmatprep.subr.mxu0 0.0
        %1643 = vmatpush1.msra.mxu0 0.0
        %1644 = vmatprep.subr.mxu0 0.0
        %1645 = vmatpush1.msra.mxu0 0.0
        %1646 = vmatprep.subr.mxu0 0.0
        %1647 = vmatpush1.msra.mxu0 0.0
        %1648 = vmatprep.subr.mxu0 0.0
        %1649 = vmatpush1.msra.mxu0 %v1553
        %1650 = vmatprep.subr.mxu0 0.0
        %1651 = vmatpush1.msra.mxu0 %v1552
        %1652 = vmatprep.subr.mxu0 0.0
        %1653 = vmatpush1.msra.mxu0 %v1551
        %1654 = vmatprep.subr.mxu0 0.0
        %1655 = vmatpush1.msra.mxu0 %v1550
        %1656 = vmatprep.subr.mxu0 0.0
        %1657 = vmatpush2.msra.mxu0 0.0
        %1658 = vmatprep.subr.mxu0 0.0
        %1659 = vmatpush2.msra.mxu0 0.0
        %1660 = vmatprep.subr.mxu0 0.0
        %1661 = vmatpush2.msra.mxu0 0.0
        %1662 = vmatprep.subr.mxu0 0.0
        %1663 = vmatpush2.msra.mxu0 0.0
        %1664 = vmatprep.subr.mxu0 0.0
        %1665 = vmatpush2.msra.mxu0 0.0
        %1666 = vmatprep.subr.mxu0 0.0
        %1667 = vmatpush2.msra.mxu0 0.0
        %1668 = vmatprep.subr.mxu0 0.0
        %1669 = vmatpush2.msra.mxu0 0.0
        %1670 = vmatprep.subr.mxu0 0.0
        %1671 = vmatpush2.msra.mxu0 0.0
        %1672 = vmatprep.subr.mxu0 0.0
        %1673 = vmatpush2.msra.mxu0 0.0
        %1674 = vmatprep.subr.mxu0 0.0
        %1675 = vmatpush2.msra.mxu0 0.0
        %1676 = vmatprep.subr.mxu0 0.0
        %1677 = vmatpush2.msra.mxu0 0.0
        %1678 = vmatprep.subr.mxu0 0.0
        %1679 = vmatpush2.msra.mxu0 0.0
        %1680 = vmatprep.subr.mxu0 0.0
        %1681 = vmatpush2.msra.mxu0 0.0
        %1682 = vmatprep.subr.mxu0 0.0
        %1683 = vmatpush2.msra.mxu0 0.0
        %1684 = vmatprep.subr.mxu0 0.0
        %1685 = vmatpush2.msra.mxu0 0.0
        %1686 = vmatprep.subr.mxu0 0.0
        %1687 = vmatpush2.msra.mxu0 0.0
        %1688 = vmatprep.mubr.f32.mxu0 0.0
        %1689 = vmatmul.mubr.f32.gmra.mxu0 %v1375
        %v1690 = vpop.f32.mrf.mxu0
        %v1691 = vadd.f32 %v1621, %v1690
        %v1692 = vpop.f32.mrf.mxu0
        %1693 = vdwg.mxu0
        %v1694 = vmax.f32 %v1514, %v1691
        %s1695 = scalar_lea.vmem %s3, 576
        %v1696 = vld [vmem:[%s1695] sm:$0xff]
        %v1697 = vld [vmem:[%s1695 + $0x8] sm:$0xff]
        %v1698 = vld [vmem:[%s1695 + $0x10] sm:$0xff]
        %v1699 = vld [vmem:[%s1695 + $0x18] sm:$0xff]
        %v1700 = vld [vmem:[%s1695 + $0x20] sm:$0xff]
        %v1701 = vld [vmem:[%s1695 + $0x28] sm:$0xff]
        %v1702 = vld [vmem:[%s1695 + $0x30] sm:$0xff]
        %v1703 = vld [vmem:[%s1695 + $0x38] sm:$0xff]
        %v1704 = vld [vmem:[%s1695 + $0x40] sm:$0xff]
        %v1705 = vld [vmem:[%s1695 + $0x48] sm:$0xff]
        %v1706 = vld [vmem:[%s1695 + $0x50] sm:$0xff]
        %v1707 = vld [vmem:[%s1695 + $0x58] sm:$0xff]
        %v1708 = vld [vmem:[%s1695 + $0x60] sm:$0xff]
        %v1709 = vld [vmem:[%s1695 + $0x68] sm:$0xff]
        %v1710 = vld [vmem:[%s1695 + $0x70] sm:$0xff]
        %v1711 = vld [vmem:[%s1695 + $0x78] sm:$0xff]
        %v1712 = vld [vmem:[%s1695 + $0x80] sm:$0xff]
        %v1713 = vld [vmem:[%s1695 + $0x88] sm:$0xff]
        %v1714 = vld [vmem:[%s1695 + $0x90] sm:$0xff]
        %v1715 = vld [vmem:[%s1695 + $0x98] sm:$0xff]
        %v1716 = vld [vmem:[%s1695 + $0xa0] sm:$0xff]
        %v1717 = vld [vmem:[%s1695 + $0xa8] sm:$0xff]
        %v1718 = vld [vmem:[%s1695 + $0xb0] sm:$0xff]
        %v1719 = vld [vmem:[%s1695 + $0xb8] sm:$0xff]
        %v1720 = vld [vmem:[%s1695 + $0xc0] sm:$0xff]
        %v1721 = vld [vmem:[%s1695 + $0xc8] sm:$0xff]
        %v1722 = vld [vmem:[%s1695 + $0xd0] sm:$0xff]
        %v1723 = vld [vmem:[%s1695 + $0xd8] sm:$0xff]
        %v1724 = vld [vmem:[%s1695 + $0xe0] sm:$0xff]
        %v1725 = vld [vmem:[%s1695 + $0xe8] sm:$0xff]
        %v1726 = vld [vmem:[%s1695 + $0xf0] sm:$0xff]
        %v1727 = vld [vmem:[%s1695 + $0xf8] sm:$0xff]
        %v1728 = vld [vmem:[%s1695 + $0x100] sm:$0xff]
        %v1729 = vld [vmem:[%s1695 + $0x108] sm:$0xff]
        %v1730 = vld [vmem:[%s1695 + $0x110] sm:$0xff]
        %v1731 = vld [vmem:[%s1695 + $0x118] sm:$0xff]
        %1732 = vmatprep.subr.mxu0 0.0
        %1733 = vmatpush1.msra.mxu0 %v1711
        %1734 = vmatprep.subr.mxu0 0.0
        %1735 = vmatpush1.msra.mxu0 %v1710
        %1736 = vmatprep.subr.mxu0 0.0
        %1737 = vmatpush1.msra.mxu0 %v1709
        %1738 = vmatprep.subr.mxu0 0.0
        %1739 = vmatpush1.msra.mxu0 %v1708
        %1740 = vmatprep.subr.mxu0 0.0
        %1741 = vmatpush1.msra.mxu0 %v1707
        %1742 = vmatprep.subr.mxu0 0.0
        %1743 = vmatpush1.msra.mxu0 %v1706
        %1744 = vmatprep.subr.mxu0 0.0
        %1745 = vmatpush1.msra.mxu0 %v1705
        %1746 = vmatprep.subr.mxu0 0.0
        %1747 = vmatpush1.msra.mxu0 %v1704
        %1748 = vmatprep.subr.mxu0 0.0
        %1749 = vmatpush1.msra.mxu0 %v1703
        %1750 = vmatprep.subr.mxu0 0.0
        %1751 = vmatpush1.msra.mxu0 %v1702
        %1752 = vmatprep.subr.mxu0 0.0
        %1753 = vmatpush1.msra.mxu0 %v1701
        %1754 = vmatprep.subr.mxu0 0.0
        %1755 = vmatpush1.msra.mxu0 %v1700
        %1756 = vmatprep.subr.mxu0 0.0
        %1757 = vmatpush1.msra.mxu0 %v1699
        %1758 = vmatprep.subr.mxu0 0.0
        %1759 = vmatpush1.msra.mxu0 %v1698
        %1760 = vmatprep.subr.mxu0 0.0
        %1761 = vmatpush1.msra.mxu0 %v1697
        %1762 = vmatprep.subr.mxu0 0.0
        %1763 = vmatpush1.msra.mxu0 %v1696
        %1764 = vmatprep.subr.mxu0 0.0
        %1765 = vmatpush2.msra.mxu0 %v1727
        %1766 = vmatprep.subr.mxu0 0.0
        %1767 = vmatpush2.msra.mxu0 %v1726
        %1768 = vmatprep.subr.mxu0 0.0
        %1769 = vmatpush2.msra.mxu0 %v1725
        %1770 = vmatprep.subr.mxu0 0.0
        %1771 = vmatpush2.msra.mxu0 %v1724
        %1772 = vmatprep.subr.mxu0 0.0
        %1773 = vmatpush2.msra.mxu0 %v1723
        %1774 = vmatprep.subr.mxu0 0.0
        %1775 = vmatpush2.msra.mxu0 %v1722
        %1776 = vmatprep.subr.mxu0 0.0
        %1777 = vmatpush2.msra.mxu0 %v1721
        %1778 = vmatprep.subr.mxu0 0.0
        %1779 = vmatpush2.msra.mxu0 %v1720
        %1780 = vmatprep.subr.mxu0 0.0
        %1781 = vmatpush2.msra.mxu0 %v1719
        %1782 = vmatprep.subr.mxu0 0.0
        %1783 = vmatpush2.msra.mxu0 %v1718
        %1784 = vmatprep.subr.mxu0 0.0
        %1785 = vmatpush2.msra.mxu0 %v1717
        %1786 = vmatprep.subr.mxu0 0.0
        %1787 = vmatpush2.msra.mxu0 %v1716
        %1788 = vmatprep.subr.mxu0 0.0
        %1789 = vmatpush2.msra.mxu0 %v1715
        %1790 = vmatprep.subr.mxu0 0.0
        %1791 = vmatpush2.msra.mxu0 %v1714
        %1792 = vmatprep.subr.mxu0 0.0
        %1793 = vmatpush2.msra.mxu0 %v1713
        %1794 = vmatprep.subr.mxu0 0.0
        %1795 = vmatpush2.msra.mxu0 %v1712
        %1796 = vmatprep.mubr.f32.mxu0 %v1335
        %1797 = vmatmul.mubr.f32.gmra.mxu0 %v1334
        %v1798 = vpop.f32.mrf.mxu0
        %v1799 = vadd.f32 0.0, %v1798
        %v1800 = vpop.f32.mrf.mxu0
        %1801 = vdwg.mxu0
        %1802 = vmatprep.subr.mxu0 0.0
        %1803 = vmatpush1.msra.mxu0 0.0
        %1804 = vmatprep.subr.mxu0 0.0
        %1805 = vmatpush1.msra.mxu0 0.0
        %1806 = vmatprep.subr.mxu0 0.0
        %1807 = vmatpush1.msra.mxu0 0.0
        %1808 = vmatprep.subr.mxu0 0.0
        %1809 = vmatpush1.msra.mxu0 0.0
        %1810 = vmatprep.subr.mxu0 0.0
        %1811 = vmatpush1.msra.mxu0 0.0
        %1812 = vmatprep.subr.mxu0 0.0
        %1813 = vmatpush1.msra.mxu0 0.0
        %1814 = vmatprep.subr.mxu0 0.0
        %1815 = vmatpush1.msra.mxu0 0.0
        %1816 = vmatprep.subr.mxu0 0.0
        %1817 = vmatpush1.msra.mxu0 0.0
        %1818 = vmatprep.subr.mxu0 0.0
        %1819 = vmatpush1.msra.mxu0 0.0
        %1820 = vmatprep.subr.mxu0 0.0
        %1821 = vmatpush1.msra.mxu0 0.0
        %1822 = vmatprep.subr.mxu0 0.0
        %1823 = vmatpush1.msra.mxu0 0.0
        %1824 = vmatprep.subr.mxu0 0.0
        %1825 = vmatpush1.msra.mxu0 0.0
        %1826 = vmatprep.subr.mxu0 0.0
        %1827 = vmatpush1.msra.mxu0 %v1731
        %1828 = vmatprep.subr.mxu0 0.0
        %1829 = vmatpush1.msra.mxu0 %v1730
        %1830 = vmatprep.subr.mxu0 0.0
        %1831 = vmatpush1.msra.mxu0 %v1729
        %1832 = vmatprep.subr.mxu0 0.0
        %1833 = vmatpush1.msra.mxu0 %v1728
        %1834 = vmatprep.subr.mxu0 0.0
        %1835 = vmatpush2.msra.mxu0 0.0
        %1836 = vmatprep.subr.mxu0 0.0
        %1837 = vmatpush2.msra.mxu0 0.0
        %1838 = vmatprep.subr.mxu0 0.0
        %1839 = vmatpush2.msra.mxu0 0.0
        %1840 = vmatprep.subr.mxu0 0.0
        %1841 = vmatpush2.msra.mxu0 0.0
        %1842 = vmatprep.subr.mxu0 0.0
        %1843 = vmatpush2.msra.mxu0 0.0
        %1844 = vmatprep.subr.mxu0 0.0
        %1845 = vmatpush2.msra.mxu0 0.0
        %1846 = vmatprep.subr.mxu0 0.0
        %1847 = vmatpush2.msra.mxu0 0.0
        %1848 = vmatprep.subr.mxu0 0.0
        %1849 = vmatpush2.msra.mxu0 0.0
        %1850 = vmatprep.subr.mxu0 0.0
        %1851 = vmatpush2.msra.mxu0 0.0
        %1852 = vmatprep.subr.mxu0 0.0
        %1853 = vmatpush2.msra.mxu0 0.0
        %1854 = vmatprep.subr.mxu0 0.0
        %1855 = vmatpush2.msra.mxu0 0.0
        %1856 = vmatprep.subr.mxu0 0.0
        %1857 = vmatpush2.msra.mxu0 0.0
        %1858 = vmatprep.subr.mxu0 0.0
        %1859 = vmatpush2.msra.mxu0 0.0
        %1860 = vmatprep.subr.mxu0 0.0
        %1861 = vmatpush2.msra.mxu0 0.0
        %1862 = vmatprep.subr.mxu0 0.0
        %1863 = vmatpush2.msra.mxu0 0.0
        %1864 = vmatprep.subr.mxu0 0.0
        %1865 = vmatpush2.msra.mxu0 0.0
        %1866 = vmatprep.mubr.f32.mxu0 0.0
        %1867 = vmatmul.mubr.f32.gmra.mxu0 %v1375
        %v1868 = vpop.f32.mrf.mxu0
        %v1869 = vadd.f32 %v1799, %v1868
        %v1870 = vpop.f32.mrf.mxu0
        %1871 = vdwg.mxu0
        %v1872 = vmax.f32 %v1694, %v1869
        %s1873 = scalar_lea.vmem %s3, 864
        %v1874 = vld [vmem:[%s1873] sm:$0xff]
        %v1875 = vld [vmem:[%s1873 + $0x8] sm:$0xff]
        %v1876 = vld [vmem:[%s1873 + $0x10] sm:$0xff]
        %v1877 = vld [vmem:[%s1873 + $0x18] sm:$0xff]
        %v1878 = vld [vmem:[%s1873 + $0x20] sm:$0xff]
        %v1879 = vld [vmem:[%s1873 + $0x28] sm:$0xff]
        %v1880 = vld [vmem:[%s1873 + $0x30] sm:$0xff]
        %v1881 = vld [vmem:[%s1873 + $0x38] sm:$0xff]
        %v1882 = vld [vmem:[%s1873 + $0x40] sm:$0xff]
        %v1883 = vld [vmem:[%s1873 + $0x48] sm:$0xff]
        %v1884 = vld [vmem:[%s1873 + $0x50] sm:$0xff]
        %v1885 = vld [vmem:[%s1873 + $0x58] sm:$0xff]
        %v1886 = vld [vmem:[%s1873 + $0x60] sm:$0xff]
        %v1887 = vld [vmem:[%s1873 + $0x68] sm:$0xff]
        %v1888 = vld [vmem:[%s1873 + $0x70] sm:$0xff]
        %v1889 = vld [vmem:[%s1873 + $0x78] sm:$0xff]
        %v1890 = vld [vmem:[%s1873 + $0x80] sm:$0xff]
        %v1891 = vld [vmem:[%s1873 + $0x88] sm:$0xff]
        %v1892 = vld [vmem:[%s1873 + $0x90] sm:$0xff]
        %v1893 = vld [vmem:[%s1873 + $0x98] sm:$0xff]
        %v1894 = vld [vmem:[%s1873 + $0xa0] sm:$0xff]
        %v1895 = vld [vmem:[%s1873 + $0xa8] sm:$0xff]
        %v1896 = vld [vmem:[%s1873 + $0xb0] sm:$0xff]
        %v1897 = vld [vmem:[%s1873 + $0xb8] sm:$0xff]
        %v1898 = vld [vmem:[%s1873 + $0xc0] sm:$0xff]
        %v1899 = vld [vmem:[%s1873 + $0xc8] sm:$0xff]
        %v1900 = vld [vmem:[%s1873 + $0xd0] sm:$0xff]
        %v1901 = vld [vmem:[%s1873 + $0xd8] sm:$0xff]
        %v1902 = vld [vmem:[%s1873 + $0xe0] sm:$0xff]
        %v1903 = vld [vmem:[%s1873 + $0xe8] sm:$0xff]
        %v1904 = vld [vmem:[%s1873 + $0xf0] sm:$0xff]
        %v1905 = vld [vmem:[%s1873 + $0xf8] sm:$0xff]
        %v1906 = vld [vmem:[%s1873 + $0x100] sm:$0xff]
        %v1907 = vld [vmem:[%s1873 + $0x108] sm:$0xff]
        %v1908 = vld [vmem:[%s1873 + $0x110] sm:$0xff]
        %v1909 = vld [vmem:[%s1873 + $0x118] sm:$0xff]
        %1910 = vmatprep.subr.mxu0 0.0
        %1911 = vmatpush1.msra.mxu0 %v1889
        %1912 = vmatprep.subr.mxu0 0.0
        %1913 = vmatpush1.msra.mxu0 %v1888
        %1914 = vmatprep.subr.mxu0 0.0
        %1915 = vmatpush1.msra.mxu0 %v1887
        %1916 = vmatprep.subr.mxu0 0.0
        %1917 = vmatpush1.msra.mxu0 %v1886
        %1918 = vmatprep.subr.mxu0 0.0
        %1919 = vmatpush1.msra.mxu0 %v1885
        %1920 = vmatprep.subr.mxu0 0.0
        %1921 = vmatpush1.msra.mxu0 %v1884
        %1922 = vmatprep.subr.mxu0 0.0
        %1923 = vmatpush1.msra.mxu0 %v1883
        %1924 = vmatprep.subr.mxu0 0.0
        %1925 = vmatpush1.msra.mxu0 %v1882
        %1926 = vmatprep.subr.mxu0 0.0
        %1927 = vmatpush1.msra.mxu0 %v1881
        %1928 = vmatprep.subr.mxu0 0.0
        %1929 = vmatpush1.msra.mxu0 %v1880
        %1930 = vmatprep.subr.mxu0 0.0
        %1931 = vmatpush1.msra.mxu0 %v1879
        %1932 = vmatprep.subr.mxu0 0.0
        %1933 = vmatpush1.msra.mxu0 %v1878
        %1934 = vmatprep.subr.mxu0 0.0
        %1935 = vmatpush1.msra.mxu0 %v1877
        %1936 = vmatprep.subr.mxu0 0.0
        %1937 = vmatpush1.msra.mxu0 %v1876
        %1938 = vmatprep.subr.mxu0 0.0
        %1939 = vmatpush1.msra.mxu0 %v1875
        %1940 = vmatprep.subr.mxu0 0.0
        %1941 = vmatpush1.msra.mxu0 %v1874
        %1942 = vmatprep.subr.mxu0 0.0
        %1943 = vmatpush2.msra.mxu0 %v1905
        %1944 = vmatprep.subr.mxu0 0.0
        %1945 = vmatpush2.msra.mxu0 %v1904
        %1946 = vmatprep.subr.mxu0 0.0
        %1947 = vmatpush2.msra.mxu0 %v1903
        %1948 = vmatprep.subr.mxu0 0.0
        %1949 = vmatpush2.msra.mxu0 %v1902
        %1950 = vmatprep.subr.mxu0 0.0
        %1951 = vmatpush2.msra.mxu0 %v1901
        %1952 = vmatprep.subr.mxu0 0.0
        %1953 = vmatpush2.msra.mxu0 %v1900
        %1954 = vmatprep.subr.mxu0 0.0
        %1955 = vmatpush2.msra.mxu0 %v1899
        %1956 = vmatprep.subr.mxu0 0.0
        %1957 = vmatpush2.msra.mxu0 %v1898
        %1958 = vmatprep.subr.mxu0 0.0
        %1959 = vmatpush2.msra.mxu0 %v1897
        %1960 = vmatprep.subr.mxu0 0.0
        %1961 = vmatpush2.msra.mxu0 %v1896
        %1962 = vmatprep.subr.mxu0 0.0
        %1963 = vmatpush2.msra.mxu0 %v1895
        %1964 = vmatprep.subr.mxu0 0.0
        %1965 = vmatpush2.msra.mxu0 %v1894
        %1966 = vmatprep.subr.mxu0 0.0
        %1967 = vmatpush2.msra.mxu0 %v1893
        %1968 = vmatprep.subr.mxu0 0.0
        %1969 = vmatpush2.msra.mxu0 %v1892
        %1970 = vmatprep.subr.mxu0 0.0
        %1971 = vmatpush2.msra.mxu0 %v1891
        %1972 = vmatprep.subr.mxu0 0.0
        %1973 = vmatpush2.msra.mxu0 %v1890
        %1974 = vmatprep.mubr.f32.mxu0 %v1335
        %1975 = vmatmul.mubr.f32.gmra.mxu0 %v1334
        %v1976 = vpop.f32.mrf.mxu0
        %v1977 = vadd.f32 0.0, %v1976
        %v1978 = vpop.f32.mrf.mxu0
        %1979 = vdwg.mxu0
        %1980 = vmatprep.subr.mxu0 0.0
        %1981 = vmatpush1.msra.mxu0 0.0
        %1982 = vmatprep.subr.mxu0 0.0
        %1983 = vmatpush1.msra.mxu0 0.0
        %1984 = vmatprep.subr.mxu0 0.0
        %1985 = vmatpush1.msra.mxu0 0.0
        %1986 = vmatprep.subr.mxu0 0.0
        %1987 = vmatpush1.msra.mxu0 0.0
        %1988 = vmatprep.subr.mxu0 0.0
        %1989 = vmatpush1.msra.mxu0 0.0
        %1990 = vmatprep.subr.mxu0 0.0
        %1991 = vmatpush1.msra.mxu0 0.0
        %1992 = vmatprep.subr.mxu0 0.0
        %1993 = vmatpush1.msra.mxu0 0.0
        %1994 = vmatprep.subr.mxu0 0.0
        %1995 = vmatpush1.msra.mxu0 0.0
        %1996 = vmatprep.subr.mxu0 0.0
        %1997 = vmatpush1.msra.mxu0 0.0
        %1998 = vmatprep.subr.mxu0 0.0
        %1999 = vmatpush1.msra.mxu0 0.0
        %2000 = vmatprep.subr.mxu0 0.0
        %2001 = vmatpush1.msra.mxu0 0.0
        %2002 = vmatprep.subr.mxu0 0.0
        %2003 = vmatpush1.msra.mxu0 0.0
        %2004 = vmatprep.subr.mxu0 0.0
        %2005 = vmatpush1.msra.mxu0 %v1909
        %2006 = vmatprep.subr.mxu0 0.0
        %2007 = vmatpush1.msra.mxu0 %v1908
        %2008 = vmatprep.subr.mxu0 0.0
        %2009 = vmatpush1.msra.mxu0 %v1907
        %2010 = vmatprep.subr.mxu0 0.0
        %2011 = vmatpush1.msra.mxu0 %v1906
        %2012 = vmatprep.subr.mxu0 0.0
        %2013 = vmatpush2.msra.mxu0 0.0
        %2014 = vmatprep.subr.mxu0 0.0
        %2015 = vmatpush2.msra.mxu0 0.0
        %2016 = vmatprep.subr.mxu0 0.0
        %2017 = vmatpush2.msra.mxu0 0.0
        %2018 = vmatprep.subr.mxu0 0.0
        %2019 = vmatpush2.msra.mxu0 0.0
        %2020 = vmatprep.subr.mxu0 0.0
        %2021 = vmatpush2.msra.mxu0 0.0
        %2022 = vmatprep.subr.mxu0 0.0
        %2023 = vmatpush2.msra.mxu0 0.0
        %2024 = vmatprep.subr.mxu0 0.0
        %2025 = vmatpush2.msra.mxu0 0.0
        %2026 = vmatprep.subr.mxu0 0.0
        %2027 = vmatpush2.msra.mxu0 0.0
        %2028 = vmatprep.subr.mxu0 0.0
        %2029 = vmatpush2.msra.mxu0 0.0
        %2030 = vmatprep.subr.mxu0 0.0
        %2031 = vmatpush2.msra.mxu0 0.0
        %2032 = vmatprep.subr.mxu0 0.0
        %2033 = vmatpush2.msra.mxu0 0.0
        %2034 = vmatprep.subr.mxu0 0.0
        %2035 = vmatpush2.msra.mxu0 0.0
        %2036 = vmatprep.subr.mxu0 0.0
        %2037 = vmatpush2.msra.mxu0 0.0
        %2038 = vmatprep.subr.mxu0 0.0
        %2039 = vmatpush2.msra.mxu0 0.0
        %2040 = vmatprep.subr.mxu0 0.0
        %2041 = vmatpush2.msra.mxu0 0.0
        %2042 = vmatprep.subr.mxu0 0.0
        %2043 = vmatpush2.msra.mxu0 0.0
        %2044 = vmatprep.mubr.f32.mxu0 0.0
        %2045 = vmatmul.mubr.f32.gmra.mxu0 %v1375
        %v2046 = vpop.f32.mrf.mxu0
        %v2047 = vadd.f32 %v1977, %v2046
        %v2048 = vpop.f32.mrf.mxu0
        %2049 = vdwg.mxu0
        %v2050 = vmax.f32 %v1872, %v2047
        %vm2051 = vcmask 523264
        %2052 = vst.msk [vmem:[%s286] sm:$0xff] %vm2051, %v2050
        %v2053 = vld [vmem:[%s5] sm:$0x1]
        %v2054 = vpack.c.bf16 %v2050, %v2050
        %v2055 = vld [vmem:[%s4] sm:$0xf]
        %v2056 = vld [vmem:[%s4 + $0x4] sm:$0xf]
        %v2057 = vld [vmem:[%s4 + $0x8] sm:$0xf]
        %v2058 = vld [vmem:[%s4 + $0xc] sm:$0xf]
        %v2059 = vld [vmem:[%s4 + $0x10] sm:$0xf]
        %v2060 = vld [vmem:[%s4 + $0x14] sm:$0xf]
        %v2061 = vld [vmem:[%s4 + $0x18] sm:$0xf]
        %v2062 = vld [vmem:[%s4 + $0x1c] sm:$0xf]
        %v2071 = vunpack.c.l.b16 %v2055
        %v2072 = vunpack.c.l.b16 %v2056
        %v2073 = vunpack.c.l.b16 %v2057
        %v2074 = vunpack.c.l.b16 %v2058
        %v2075 = vunpack.c.l.b16 %v2059
        %v2076 = vunpack.c.l.b16 %v2060
        %v2077 = vunpack.c.l.b16 %v2061
        %v2078 = vunpack.c.l.b16 %v2062
        %v2079 = vpack.c.b16 %v2072, %v2071
        %v2080 = vpack.c.b16 %v2074, %v2073
        %v2081 = vpack.c.b16 %v2076, %v2075
        %v2082 = vpack.c.b16 %v2078, %v2077
        %v2088 = vsel %vm2051, %v2054, 0
        %2090 = vmatprep.subr.bf16.mxu0 0
        %2091 = vmatpush1.bf16.msra.mxu0 0
        %2092 = vmatprep.subr.bf16.mxu0 0
        %2093 = vmatpush1.bf16.msra.mxu0 0
        %2094 = vmatprep.subr.bf16.mxu0 0
        %2095 = vmatpush1.bf16.msra.mxu0 0
        %2096 = vmatprep.subr.bf16.mxu0 0
        %2097 = vmatpush1.bf16.msra.mxu0 0
        %2098 = vmatprep.subr.bf16.mxu0 0
        %2099 = vmatpush1.bf16.msra.mxu0 %v2082
        %2100 = vmatprep.subr.bf16.mxu0 0
        %2101 = vmatpush1.bf16.msra.mxu0 %v2081
        %2102 = vmatprep.subr.bf16.mxu0 0
        %2103 = vmatpush1.bf16.msra.mxu0 %v2080
        %2104 = vmatprep.subr.bf16.mxu0 0
        %2105 = vmatpush1.bf16.msra.mxu0 %v2079
        %2106 = vmatprep.subr.bf16.mxu0 0
        %2107 = vmatpush2.bf16.msra.mxu0 0
        %2108 = vmatprep.subr.bf16.mxu0 0
        %2109 = vmatpush2.bf16.msra.mxu0 0
        %2110 = vmatprep.subr.bf16.mxu0 0
        %2111 = vmatpush2.bf16.msra.mxu0 0
        %2112 = vmatprep.subr.bf16.mxu0 0
        %2113 = vmatpush2.bf16.msra.mxu0 0
        %2114 = vmatprep.subr.bf16.mxu0 0
        %2115 = vmatpush2.bf16.msra.mxu0 0
        %2116 = vmatprep.subr.bf16.mxu0 0
        %2117 = vmatpush2.bf16.msra.mxu0 0
        %2118 = vmatprep.subr.bf16.mxu0 0
        %2119 = vmatpush2.bf16.msra.mxu0 0
        %2120 = vmatprep.subr.bf16.mxu0 0
        %2121 = vmatpush2.bf16.msra.mxu0 0
        %2122 = vmatprep.mubr.bf16.mxu0 0
        %2123 = vmatmul.mubr.bf16.gmra.mxu0 %v2088
        %v2124 = vpop.f32.mrf.mxu0
        %v2125 = vadd.f32 0.0, %v2124
        %v2126 = vpop.f32.mrf.mxu0
        %v2127 = vpop.f32.mrf.mxu0
        %v2128 = vpop.f32.mrf.mxu0
        %2129 = vdwg.mxu0
        %v2130 = vadd.f32 %v2053, %v2125
        %s2131 = scalar_lea.vmem %s4, 32
        %v2132 = vld [vmem:[%s2131] sm:$0xf]
        %v2133 = vld [vmem:[%s2131 + $0x4] sm:$0xf]
        %v2134 = vld [vmem:[%s2131 + $0x8] sm:$0xf]
        %v2135 = vld [vmem:[%s2131 + $0xc] sm:$0xf]
        %v2136 = vld [vmem:[%s2131 + $0x10] sm:$0xf]
        %v2137 = vld [vmem:[%s2131 + $0x14] sm:$0xf]
        %v2138 = vld [vmem:[%s2131 + $0x18] sm:$0xf]
        %v2139 = vld [vmem:[%s2131 + $0x1c] sm:$0xf]
        %v2140 = vshrl.u32 %v2054, 16
        %v2150 = vunpack.c.l.b16 %v2132
        %v2151 = vunpack.c.l.b16 %v2133
        %v2152 = vunpack.c.l.b16 %v2134
        %v2153 = vunpack.c.l.b16 %v2135
        %v2154 = vunpack.c.l.b16 %v2136
        %v2155 = vunpack.c.l.b16 %v2137
        %v2156 = vunpack.c.l.b16 %v2138
        %v2157 = vunpack.c.l.b16 %v2139
        %v2158 = vpack.c.b16 %v2151, %v2150
        %v2159 = vpack.c.b16 %v2153, %v2152
        %v2160 = vpack.c.b16 %v2155, %v2154
        %v2161 = vpack.c.b16 %v2157, %v2156
        %v2167 = vsel %vm2051, %v2140, 0
        %2169 = vmatprep.subr.bf16.mxu0 0
        %2170 = vmatpush1.bf16.msra.mxu0 0
        %2171 = vmatprep.subr.bf16.mxu0 0
        %2172 = vmatpush1.bf16.msra.mxu0 0
        %2173 = vmatprep.subr.bf16.mxu0 0
        %2174 = vmatpush1.bf16.msra.mxu0 0
        %2175 = vmatprep.subr.bf16.mxu0 0
        %2176 = vmatpush1.bf16.msra.mxu0 0
        %2177 = vmatprep.subr.bf16.mxu0 0
        %2178 = vmatpush1.bf16.msra.mxu0 %v2161
        %2179 = vmatprep.subr.bf16.mxu0 0
        %2180 = vmatpush1.bf16.msra.mxu0 %v2160
        %2181 = vmatprep.subr.bf16.mxu0 0
        %2182 = vmatpush1.bf16.msra.mxu0 %v2159
        %2183 = vmatprep.subr.bf16.mxu0 0
        %2184 = vmatpush1.bf16.msra.mxu0 %v2158
        %2185 = vmatprep.subr.bf16.mxu0 0
        %2186 = vmatpush2.bf16.msra.mxu0 0
        %2187 = vmatprep.subr.bf16.mxu0 0
        %2188 = vmatpush2.bf16.msra.mxu0 0
        %2189 = vmatprep.subr.bf16.mxu0 0
        %2190 = vmatpush2.bf16.msra.mxu0 0
        %2191 = vmatprep.subr.bf16.mxu0 0
        %2192 = vmatpush2.bf16.msra.mxu0 0
        %2193 = vmatprep.subr.bf16.mxu0 0
        %2194 = vmatpush2.bf16.msra.mxu0 0
        %2195 = vmatprep.subr.bf16.mxu0 0
        %2196 = vmatpush2.bf16.msra.mxu0 0
        %2197 = vmatprep.subr.bf16.mxu0 0
        %2198 = vmatpush2.bf16.msra.mxu0 0
        %2199 = vmatprep.subr.bf16.mxu0 0
        %2200 = vmatpush2.bf16.msra.mxu0 0
        %2201 = vmatprep.mubr.bf16.mxu0 0
        %2202 = vmatmul.mubr.bf16.gmra.mxu0 %v2167
        %v2203 = vpop.f32.mrf.mxu0
        %v2204 = vadd.f32 0.0, %v2203
        %v2205 = vpop.f32.mrf.mxu0
        %v2206 = vpop.f32.mrf.mxu0
        %v2207 = vpop.f32.mrf.mxu0
        %2208 = vdwg.mxu0
        %v2209 = vadd.f32 %v2130, %v2204
        %s2210 = scalar_lea.vmem %s4, 64
        %v2211 = vld [vmem:[%s2210] sm:$0xf]
        %v2212 = vld [vmem:[%s2210 + $0x4] sm:$0xf]
        %v2213 = vld [vmem:[%s2210 + $0x8] sm:$0xf]
        %v2214 = vld [vmem:[%s2210 + $0xc] sm:$0xf]
        %v2215 = vld [vmem:[%s2210 + $0x10] sm:$0xf]
        %v2216 = vld [vmem:[%s2210 + $0x14] sm:$0xf]
        %v2217 = vld [vmem:[%s2210 + $0x18] sm:$0xf]
        %v2218 = vld [vmem:[%s2210 + $0x1c] sm:$0xf]
        %v2220 = vrot.slane %v2054, 1
        %v2229 = vunpack.c.l.b16 %v2211
        %v2230 = vunpack.c.l.b16 %v2212
        %v2231 = vunpack.c.l.b16 %v2213
        %v2232 = vunpack.c.l.b16 %v2214
        %v2233 = vunpack.c.l.b16 %v2215
        %v2234 = vunpack.c.l.b16 %v2216
        %v2235 = vunpack.c.l.b16 %v2217
        %v2236 = vunpack.c.l.b16 %v2218
        %v2237 = vpack.c.b16 %v2230, %v2229
        %v2238 = vpack.c.b16 %v2232, %v2231
        %v2239 = vpack.c.b16 %v2234, %v2233
        %v2240 = vpack.c.b16 %v2236, %v2235
        %v2246 = vsel %vm2051, %v2220, 0
        %2248 = vmatprep.subr.bf16.mxu0 0
        %2249 = vmatpush1.bf16.msra.mxu0 0
        %2250 = vmatprep.subr.bf16.mxu0 0
        %2251 = vmatpush1.bf16.msra.mxu0 0
        %2252 = vmatprep.subr.bf16.mxu0 0
        %2253 = vmatpush1.bf16.msra.mxu0 0
        %2254 = vmatprep.subr.bf16.mxu0 0
        %2255 = vmatpush1.bf16.msra.mxu0 0
        %2256 = vmatprep.subr.bf16.mxu0 0
        %2257 = vmatpush1.bf16.msra.mxu0 %v2240
        %2258 = vmatprep.subr.bf16.mxu0 0
        %2259 = vmatpush1.bf16.msra.mxu0 %v2239
        %2260 = vmatprep.subr.bf16.mxu0 0
        %2261 = vmatpush1.bf16.msra.mxu0 %v2238
        %2262 = vmatprep.subr.bf16.mxu0 0
        %2263 = vmatpush1.bf16.msra.mxu0 %v2237
        %2264 = vmatprep.subr.bf16.mxu0 0
        %2265 = vmatpush2.bf16.msra.mxu0 0
        %2266 = vmatprep.subr.bf16.mxu0 0
        %2267 = vmatpush2.bf16.msra.mxu0 0
        %2268 = vmatprep.subr.bf16.mxu0 0
        %2269 = vmatpush2.bf16.msra.mxu0 0
        %2270 = vmatprep.subr.bf16.mxu0 0
        %2271 = vmatpush2.bf16.msra.mxu0 0
        %2272 = vmatprep.subr.bf16.mxu0 0
        %2273 = vmatpush2.bf16.msra.mxu0 0
        %2274 = vmatprep.subr.bf16.mxu0 0
        %2275 = vmatpush2.bf16.msra.mxu0 0
        %2276 = vmatprep.subr.bf16.mxu0 0
        %2277 = vmatpush2.bf16.msra.mxu0 0
        %2278 = vmatprep.subr.bf16.mxu0 0
        %2279 = vmatpush2.bf16.msra.mxu0 0
        %2280 = vmatprep.mubr.bf16.mxu0 0
        %2281 = vmatmul.mubr.bf16.gmra.mxu0 %v2246
        %v2282 = vpop.f32.mrf.mxu0
        %v2283 = vadd.f32 0.0, %v2282
        %v2284 = vpop.f32.mrf.mxu0
        %v2285 = vpop.f32.mrf.mxu0
        %v2286 = vpop.f32.mrf.mxu0
        %2287 = vdwg.mxu0
        %v2288 = vadd.f32 %v2209, %v2283
        %s2289 = scalar_lea.vmem %s4, 96
        %v2290 = vld [vmem:[%s2289] sm:$0xf]
        %v2291 = vld [vmem:[%s2289 + $0x4] sm:$0xf]
        %v2292 = vld [vmem:[%s2289 + $0x8] sm:$0xf]
        %v2293 = vld [vmem:[%s2289 + $0xc] sm:$0xf]
        %v2294 = vld [vmem:[%s2289 + $0x10] sm:$0xf]
        %v2295 = vld [vmem:[%s2289 + $0x14] sm:$0xf]
        %v2296 = vld [vmem:[%s2289 + $0x18] sm:$0xf]
        %v2297 = vld [vmem:[%s2289 + $0x1c] sm:$0xf]
        %v2298 = vrot.slane %v2140, 1
        %v2307 = vunpack.c.l.b16 %v2290
        %v2308 = vunpack.c.l.b16 %v2291
        %v2309 = vunpack.c.l.b16 %v2292
        %v2310 = vunpack.c.l.b16 %v2293
        %v2311 = vunpack.c.l.b16 %v2294
        %v2312 = vunpack.c.l.b16 %v2295
        %v2313 = vunpack.c.l.b16 %v2296
        %v2314 = vunpack.c.l.b16 %v2297
        %v2315 = vpack.c.b16 %v2308, %v2307
        %v2316 = vpack.c.b16 %v2310, %v2309
        %v2317 = vpack.c.b16 %v2312, %v2311
        %v2318 = vpack.c.b16 %v2314, %v2313
        %v2324 = vsel %vm2051, %v2298, 0
        %2326 = vmatprep.subr.bf16.mxu0 0
        %2327 = vmatpush1.bf16.msra.mxu0 0
        %2328 = vmatprep.subr.bf16.mxu0 0
        %2329 = vmatpush1.bf16.msra.mxu0 0
        %2330 = vmatprep.subr.bf16.mxu0 0
        %2331 = vmatpush1.bf16.msra.mxu0 0
        %2332 = vmatprep.subr.bf16.mxu0 0
        %2333 = vmatpush1.bf16.msra.mxu0 0
        %2334 = vmatprep.subr.bf16.mxu0 0
        %2335 = vmatpush1.bf16.msra.mxu0 %v2318
        %2336 = vmatprep.subr.bf16.mxu0 0
        %2337 = vmatpush1.bf16.msra.mxu0 %v2317
        %2338 = vmatprep.subr.bf16.mxu0 0
        %2339 = vmatpush1.bf16.msra.mxu0 %v2316
        %2340 = vmatprep.subr.bf16.mxu0 0
        %2341 = vmatpush1.bf16.msra.mxu0 %v2315
        %2342 = vmatprep.subr.bf16.mxu0 0
        %2343 = vmatpush2.bf16.msra.mxu0 0
        %2344 = vmatprep.subr.bf16.mxu0 0
        %2345 = vmatpush2.bf16.msra.mxu0 0
        %2346 = vmatprep.subr.bf16.mxu0 0
        %2347 = vmatpush2.bf16.msra.mxu0 0
        %2348 = vmatprep.subr.bf16.mxu0 0
        %2349 = vmatpush2.bf16.msra.mxu0 0
        %2350 = vmatprep.subr.bf16.mxu0 0
        %2351 = vmatpush2.bf16.msra.mxu0 0
        %2352 = vmatprep.subr.bf16.mxu0 0
        %2353 = vmatpush2.bf16.msra.mxu0 0
        %2354 = vmatprep.subr.bf16.mxu0 0
        %2355 = vmatpush2.bf16.msra.mxu0 0
        %2356 = vmatprep.subr.bf16.mxu0 0
        %2357 = vmatpush2.bf16.msra.mxu0 0
        %2358 = vmatprep.mubr.bf16.mxu0 0
        %2359 = vmatmul.mubr.bf16.gmra.mxu0 %v2324
        %v2360 = vpop.f32.mrf.mxu0
        %v2361 = vadd.f32 0.0, %v2360
        %v2362 = vpop.f32.mrf.mxu0
        %v2363 = vpop.f32.mrf.mxu0
        %v2364 = vpop.f32.mrf.mxu0
        %2365 = vdwg.mxu0
        %v2366 = vadd.f32 %v2288, %v2361
        %s2367 = scalar_lea.vmem %s4, 128
        %v2368 = vld [vmem:[%s2367] sm:$0xf]
        %v2369 = vld [vmem:[%s2367 + $0x4] sm:$0xf]
        %v2370 = vld [vmem:[%s2367 + $0x8] sm:$0xf]
        %v2371 = vld [vmem:[%s2367 + $0xc] sm:$0xf]
        %v2372 = vld [vmem:[%s2367 + $0x10] sm:$0xf]
        %v2373 = vld [vmem:[%s2367 + $0x14] sm:$0xf]
        %v2374 = vld [vmem:[%s2367 + $0x18] sm:$0xf]
        %v2375 = vld [vmem:[%s2367 + $0x1c] sm:$0xf]
        %v2376 = vrot.slane %v2054, 2
        %v2385 = vunpack.c.l.b16 %v2368
        %v2386 = vunpack.c.l.b16 %v2369
        %v2387 = vunpack.c.l.b16 %v2370
        %v2388 = vunpack.c.l.b16 %v2371
        %v2389 = vunpack.c.l.b16 %v2372
        %v2390 = vunpack.c.l.b16 %v2373
        %v2391 = vunpack.c.l.b16 %v2374
        %v2392 = vunpack.c.l.b16 %v2375
        %v2393 = vpack.c.b16 %v2386, %v2385
        %v2394 = vpack.c.b16 %v2388, %v2387
        %v2395 = vpack.c.b16 %v2390, %v2389
        %v2396 = vpack.c.b16 %v2392, %v2391
        %v2402 = vsel %vm2051, %v2376, 0
        %2404 = vmatprep.subr.bf16.mxu0 0
        %2405 = vmatpush1.bf16.msra.mxu0 0
        %2406 = vmatprep.subr.bf16.mxu0 0
        %2407 = vmatpush1.bf16.msra.mxu0 0
        %2408 = vmatprep.subr.bf16.mxu0 0
        %2409 = vmatpush1.bf16.msra.mxu0 0
        %2410 = vmatprep.subr.bf16.mxu0 0
        %2411 = vmatpush1.bf16.msra.mxu0 0
        %2412 = vmatprep.subr.bf16.mxu0 0
        %2413 = vmatpush1.bf16.msra.mxu0 %v2396
        %2414 = vmatprep.subr.bf16.mxu0 0
        %2415 = vmatpush1.bf16.msra.mxu0 %v2395
        %2416 = vmatprep.subr.bf16.mxu0 0
        %2417 = vmatpush1.bf16.msra.mxu0 %v2394
        %2418 = vmatprep.subr.bf16.mxu0 0
        %2419 = vmatpush1.bf16.msra.mxu0 %v2393
        %2420 = vmatprep.subr.bf16.mxu0 0
        %2421 = vmatpush2.bf16.msra.mxu0 0
        %2422 = vmatprep.subr.bf16.mxu0 0
        %2423 = vmatpush2.bf16.msra.mxu0 0
        %2424 = vmatprep.subr.bf16.mxu0 0
        %2425 = vmatpush2.bf16.msra.mxu0 0
        %2426 = vmatprep.subr.bf16.mxu0 0
        %2427 = vmatpush2.bf16.msra.mxu0 0
        %2428 = vmatprep.subr.bf16.mxu0 0
        %2429 = vmatpush2.bf16.msra.mxu0 0
        %2430 = vmatprep.subr.bf16.mxu0 0
        %2431 = vmatpush2.bf16.msra.mxu0 0
        %2432 = vmatprep.subr.bf16.mxu0 0
        %2433 = vmatpush2.bf16.msra.mxu0 0
        %2434 = vmatprep.subr.bf16.mxu0 0
        %2435 = vmatpush2.bf16.msra.mxu0 0
        %2436 = vmatprep.mubr.bf16.mxu0 0
        %2437 = vmatmul.mubr.bf16.gmra.mxu0 %v2402
        %v2438 = vpop.f32.mrf.mxu0
        %v2439 = vadd.f32 0.0, %v2438
        %v2440 = vpop.f32.mrf.mxu0
        %v2441 = vpop.f32.mrf.mxu0
        %v2442 = vpop.f32.mrf.mxu0
        %2443 = vdwg.mxu0
        %v2444 = vadd.f32 %v2366, %v2439
        %s2445 = scalar_lea.vmem %s4, 160
        %v2446 = vld [vmem:[%s2445] sm:$0xf]
        %v2447 = vld [vmem:[%s2445 + $0x4] sm:$0xf]
        %v2448 = vld [vmem:[%s2445 + $0x8] sm:$0xf]
        %v2449 = vld [vmem:[%s2445 + $0xc] sm:$0xf]
        %v2450 = vld [vmem:[%s2445 + $0x10] sm:$0xf]
        %v2451 = vld [vmem:[%s2445 + $0x14] sm:$0xf]
        %v2452 = vld [vmem:[%s2445 + $0x18] sm:$0xf]
        %v2453 = vld [vmem:[%s2445 + $0x1c] sm:$0xf]
        %v2454 = vrot.slane %v2140, 2
        %v2463 = vunpack.c.l.b16 %v2446
        %v2464 = vunpack.c.l.b16 %v2447
        %v2465 = vunpack.c.l.b16 %v2448
        %v2466 = vunpack.c.l.b16 %v2449
        %v2467 = vunpack.c.l.b16 %v2450
        %v2468 = vunpack.c.l.b16 %v2451
        %v2469 = vunpack.c.l.b16 %v2452
        %v2470 = vunpack.c.l.b16 %v2453
        %v2471 = vpack.c.b16 %v2464, %v2463
        %v2472 = vpack.c.b16 %v2466, %v2465
        %v2473 = vpack.c.b16 %v2468, %v2467
        %v2474 = vpack.c.b16 %v2470, %v2469
        %v2480 = vsel %vm2051, %v2454, 0
        %2482 = vmatprep.subr.bf16.mxu0 0
        %2483 = vmatpush1.bf16.msra.mxu0 0
        %2484 = vmatprep.subr.bf16.mxu0 0
        %2485 = vmatpush1.bf16.msra.mxu0 0
        %2486 = vmatprep.subr.bf16.mxu0 0
        %2487 = vmatpush1.bf16.msra.mxu0 0
        %2488 = vmatprep.subr.bf16.mxu0 0
        %2489 = vmatpush1.bf16.msra.mxu0 0
        %2490 = vmatprep.subr.bf16.mxu0 0
        %2491 = vmatpush1.bf16.msra.mxu0 %v2474
        %2492 = vmatprep.subr.bf16.mxu0 0
        %2493 = vmatpush1.bf16.msra.mxu0 %v2473
        %2494 = vmatprep.subr.bf16.mxu0 0
        %2495 = vmatpush1.bf16.msra.mxu0 %v2472
        %2496 = vmatprep.subr.bf16.mxu0 0
        %2497 = vmatpush1.bf16.msra.mxu0 %v2471
        %2498 = vmatprep.subr.bf16.mxu0 0
        %2499 = vmatpush2.bf16.msra.mxu0 0
        %2500 = vmatprep.subr.bf16.mxu0 0
        %2501 = vmatpush2.bf16.msra.mxu0 0
        %2502 = vmatprep.subr.bf16.mxu0 0
        %2503 = vmatpush2.bf16.msra.mxu0 0
        %2504 = vmatprep.subr.bf16.mxu0 0
        %2505 = vmatpush2.bf16.msra.mxu0 0
        %2506 = vmatprep.subr.bf16.mxu0 0
        %2507 = vmatpush2.bf16.msra.mxu0 0
        %2508 = vmatprep.subr.bf16.mxu0 0
        %2509 = vmatpush2.bf16.msra.mxu0 0
        %2510 = vmatprep.subr.bf16.mxu0 0
        %2511 = vmatpush2.bf16.msra.mxu0 0
        %2512 = vmatprep.subr.bf16.mxu0 0
        %2513 = vmatpush2.bf16.msra.mxu0 0
        %2514 = vmatprep.mubr.bf16.mxu0 0
        %2515 = vmatmul.mubr.bf16.gmra.mxu0 %v2480
        %v2516 = vpop.f32.mrf.mxu0
        %v2517 = vadd.f32 0.0, %v2516
        %v2518 = vpop.f32.mrf.mxu0
        %v2519 = vpop.f32.mrf.mxu0
        %v2520 = vpop.f32.mrf.mxu0
        %2521 = vdwg.mxu0
        %v2522 = vadd.f32 %v2444, %v2517
        %s2523 = scalar_lea.vmem %s4, 192
        %v2524 = vld [vmem:[%s2523] sm:$0xf]
        %v2525 = vld [vmem:[%s2523 + $0x4] sm:$0xf]
        %v2526 = vld [vmem:[%s2523 + $0x8] sm:$0xf]
        %v2527 = vld [vmem:[%s2523 + $0xc] sm:$0xf]
        %v2528 = vld [vmem:[%s2523 + $0x10] sm:$0xf]
        %v2529 = vld [vmem:[%s2523 + $0x14] sm:$0xf]
        %v2530 = vld [vmem:[%s2523 + $0x18] sm:$0xf]
        %v2531 = vld [vmem:[%s2523 + $0x1c] sm:$0xf]
        %v2532 = vrot.slane %v2054, 3
        %v2541 = vunpack.c.l.b16 %v2524
        %v2542 = vunpack.c.l.b16 %v2525
        %v2543 = vunpack.c.l.b16 %v2526
        %v2544 = vunpack.c.l.b16 %v2527
        %v2545 = vunpack.c.l.b16 %v2528
        %v2546 = vunpack.c.l.b16 %v2529
        %v2547 = vunpack.c.l.b16 %v2530
        %v2548 = vunpack.c.l.b16 %v2531
        %v2549 = vpack.c.b16 %v2542, %v2541
        %v2550 = vpack.c.b16 %v2544, %v2543
        %v2551 = vpack.c.b16 %v2546, %v2545
        %v2552 = vpack.c.b16 %v2548, %v2547
        %v2558 = vsel %vm2051, %v2532, 0
        %2560 = vmatprep.subr.bf16.mxu0 0
        %2561 = vmatpush1.bf16.msra.mxu0 0
        %2562 = vmatprep.subr.bf16.mxu0 0
        %2563 = vmatpush1.bf16.msra.mxu0 0
        %2564 = vmatprep.subr.bf16.mxu0 0
        %2565 = vmatpush1.bf16.msra.mxu0 0
        %2566 = vmatprep.subr.bf16.mxu0 0
        %2567 = vmatpush1.bf16.msra.mxu0 0
        %2568 = vmatprep.subr.bf16.mxu0 0
        %2569 = vmatpush1.bf16.msra.mxu0 %v2552
        %2570 = vmatprep.subr.bf16.mxu0 0
        %2571 = vmatpush1.bf16.msra.mxu0 %v2551
        %2572 = vmatprep.subr.bf16.mxu0 0
        %2573 = vmatpush1.bf16.msra.mxu0 %v2550
        %2574 = vmatprep.subr.bf16.mxu0 0
        %2575 = vmatpush1.bf16.msra.mxu0 %v2549
        %2576 = vmatprep.subr.bf16.mxu0 0
        %2577 = vmatpush2.bf16.msra.mxu0 0
        %2578 = vmatprep.subr.bf16.mxu0 0
        %2579 = vmatpush2.bf16.msra.mxu0 0
        %2580 = vmatprep.subr.bf16.mxu0 0
        %2581 = vmatpush2.bf16.msra.mxu0 0
        %2582 = vmatprep.subr.bf16.mxu0 0
        %2583 = vmatpush2.bf16.msra.mxu0 0
        %2584 = vmatprep.subr.bf16.mxu0 0
        %2585 = vmatpush2.bf16.msra.mxu0 0
        %2586 = vmatprep.subr.bf16.mxu0 0
        %2587 = vmatpush2.bf16.msra.mxu0 0
        %2588 = vmatprep.subr.bf16.mxu0 0
        %2589 = vmatpush2.bf16.msra.mxu0 0
        %2590 = vmatprep.subr.bf16.mxu0 0
        %2591 = vmatpush2.bf16.msra.mxu0 0
        %2592 = vmatprep.mubr.bf16.mxu0 0
        %2593 = vmatmul.mubr.bf16.gmra.mxu0 %v2558
        %v2594 = vpop.f32.mrf.mxu0
        %v2595 = vadd.f32 0.0, %v2594
        %v2596 = vpop.f32.mrf.mxu0
        %v2597 = vpop.f32.mrf.mxu0
        %v2598 = vpop.f32.mrf.mxu0
        %2599 = vdwg.mxu0
        %v2600 = vadd.f32 %v2522, %v2595
        %s2601 = scalar_lea.vmem %s4, 224
        %v2602 = vld [vmem:[%s2601] sm:$0xf]
        %v2603 = vld [vmem:[%s2601 + $0x4] sm:$0xf]
        %v2604 = vld [vmem:[%s2601 + $0x8] sm:$0xf]
        %v2605 = vld [vmem:[%s2601 + $0xc] sm:$0xf]
        %v2606 = vld [vmem:[%s2601 + $0x10] sm:$0xf]
        %v2607 = vld [vmem:[%s2601 + $0x14] sm:$0xf]
        %v2608 = vld [vmem:[%s2601 + $0x18] sm:$0xf]
        %v2609 = vld [vmem:[%s2601 + $0x1c] sm:$0xf]
        %v2610 = vrot.slane %v2140, 3
        %v2619 = vunpack.c.l.b16 %v2602
        %v2620 = vunpack.c.l.b16 %v2603
        %v2621 = vunpack.c.l.b16 %v2604
        %v2622 = vunpack.c.l.b16 %v2605
        %v2623 = vunpack.c.l.b16 %v2606
        %v2624 = vunpack.c.l.b16 %v2607
        %v2625 = vunpack.c.l.b16 %v2608
        %v2626 = vunpack.c.l.b16 %v2609
        %v2627 = vpack.c.b16 %v2620, %v2619
        %v2628 = vpack.c.b16 %v2622, %v2621
        %v2629 = vpack.c.b16 %v2624, %v2623
        %v2630 = vpack.c.b16 %v2626, %v2625
        %v2636 = vsel %vm2051, %v2610, 0
        %2638 = vmatprep.subr.bf16.mxu0 0
        %2639 = vmatpush1.bf16.msra.mxu0 0
        %2640 = vmatprep.subr.bf16.mxu0 0
        %2641 = vmatpush1.bf16.msra.mxu0 0
        %2642 = vmatprep.subr.bf16.mxu0 0
        %2643 = vmatpush1.bf16.msra.mxu0 0
        %2644 = vmatprep.subr.bf16.mxu0 0
        %2645 = vmatpush1.bf16.msra.mxu0 0
        %2646 = vmatprep.subr.bf16.mxu0 0
        %2647 = vmatpush1.bf16.msra.mxu0 %v2630
        %2648 = vmatprep.subr.bf16.mxu0 0
        %2649 = vmatpush1.bf16.msra.mxu0 %v2629
        %2650 = vmatprep.subr.bf16.mxu0 0
        %2651 = vmatpush1.bf16.msra.mxu0 %v2628
        %2652 = vmatprep.subr.bf16.mxu0 0
        %2653 = vmatpush1.bf16.msra.mxu0 %v2627
        %2654 = vmatprep.subr.bf16.mxu0 0
        %2655 = vmatpush2.bf16.msra.mxu0 0
        %2656 = vmatprep.subr.bf16.mxu0 0
        %2657 = vmatpush2.bf16.msra.mxu0 0
        %2658 = vmatprep.subr.bf16.mxu0 0
        %2659 = vmatpush2.bf16.msra.mxu0 0
        %2660 = vmatprep.subr.bf16.mxu0 0
        %2661 = vmatpush2.bf16.msra.mxu0 0
        %2662 = vmatprep.subr.bf16.mxu0 0
        %2663 = vmatpush2.bf16.msra.mxu0 0
        %2664 = vmatprep.subr.bf16.mxu0 0
        %2665 = vmatpush2.bf16.msra.mxu0 0
        %2666 = vmatprep.subr.bf16.mxu0 0
        %2667 = vmatpush2.bf16.msra.mxu0 0
        %2668 = vmatprep.subr.bf16.mxu0 0
        %2669 = vmatpush2.bf16.msra.mxu0 0
        %2670 = vmatprep.mubr.bf16.mxu0 0
        %2671 = vmatmul.mubr.bf16.gmra.mxu0 %v2636
        %v2672 = vpop.f32.mrf.mxu0
        %v2673 = vadd.f32 0.0, %v2672
        %v2674 = vpop.f32.mrf.mxu0
        %v2675 = vpop.f32.mrf.mxu0
        %v2676 = vpop.f32.mrf.mxu0
        %2677 = vdwg.mxu0
        %v2678 = vadd.f32 %v2600, %v2673
        %vm2679 = vcmask 73728
        %2680 = vst.msk [vmem:[%s277] sm:$0x1] %vm2679, %v2678
        %p2681 = scmp.lt.s32.totalorder %s22, 1
        %s2682 = scalar_select %p2681, %s22, 1
        %s2683 = smul.addr %s2682, 8
        %s2684 = scalar_lea.vmem %s6, %s2683
        %s2685 = sand.u32 %s187, 1
        %s2686 = scalar_lea.sflag [#allocation3], %s2685
        %s2687 = sand.u32 %s187, 1
        %s2688 = scalar_lea.vmem [#allocation2], %s2687
        // Predicated region
        $region45: #{forward.1} parent=43 // pred_check
          %p2689 = pneg %p171
        $region46: #{forward.1} parent=43 // pred_check_branch
          %2691 = sbr.rel (%p2689) target = $region48
        $region47: #{forward.1} parent=43 // pred_region
          _
        $region48: #{forward.1} parent=43 // pred_fallthru
          _
        // Predicated region
        $region49: #{forward.1} parent=43 // pred_check
          %p2692 = pneg %p197
        $region50: #{forward.1} parent=43 // pred_check_branch
          %2694 = sbr.rel (%p2692) target = $region52
        $region51: #{forward.1} parent=43 // pred_region
          %s2696 = ssub.s32 16, 16
          %2697 = vsyncadd %s2686, %s2696
          %s2698 = smul.addr %s22, 16
          %s2699 = scalar_lea.hbm %s7, %s2698
          %s2701 = sshll.u32 %s2688, 4
          %s2702 = int_to_ptr.vmem [resolvable:$true] %s2701
          %2704 = dma.vmem_to_hbm [thread:$0]  %s2702, 16, %s2699, %s2686
        $region52: #{forward.1} parent=43 // pred_fallthru
          _
      $region44: #{forward.1} parent=5 // pred_fallthru
        _
      %p2705 = scmp.le.s32.totalorder 2, %s17
      // Predicated region
      $region53: #{forward.1} parent=5 // pred_check
        %p2706 = pneg %p2705
      $region54: #{forward.1} parent=5 // pred_check_branch
        %2708 = sbr.rel (%p2706) target = $region56
      $region55: #{forward.1} parent=5 // pred_region
        %s2709 = ssub.s32 %s17, 2
        // Predicated region
        $region57: #{forward.1} parent=55 // pred_check
          %p2710 = pneg %p177
        $region58: #{forward.1} parent=55 // pred_check_branch
          %2712 = sbr.rel (%p2710) target = $region60
        $region59: #{forward.1} parent=55 // pred_region
          %p2713 = scmp.lt.s32.totalorder %s23, 1
          %s2714 = scalar_select %p2713, %s23, 1
          %s2715 = smul.addr %s2714, 8
          %s2716 = scalar_lea.vmem %s6, %s2715
        $region60: #{forward.1} parent=55 // pred_fallthru
          _
        // Predicated region
        $region61: #{forward.1} parent=55 // pred_check
          %p2717 = pneg %p203
        $region62: #{forward.1} parent=55 // pred_check_branch
          %2719 = sbr.rel (%p2717) target = $region64
        $region63: #{forward.1} parent=55 // pred_region
          %s2720 = sand.u32 %s188, 1
          %s2721 = scalar_lea.sflag [#allocation3], %s2720
          %s2722 = sand.u32 %s188, 1
          %s2723 = scalar_lea.vmem [#allocation2], %s2722
          %2724 = dma.done %s2721, 16
        $region64: #{forward.1} parent=55 // pred_fallthru
          _
      $region56: #{forward.1} parent=5 // pred_fallthru
        _
    $region6: #{forward.1} parent=1 // loop_footer
      %s21 = sadd.s32 1, %s17
    $region7: #{forward.1} parent=1 // loop_footer_branch
      %16 = sbr.rel target = $region3
    $region8: #{forward.1} parent=1 // loop_exit
      _
    %2725 = vsyncpa [#allocation3], 1
    %s2726 = scalar_lea.sflag [#allocation3], 1
    %2727 = vsyncpa %s2726, 1

</llo_original>
